<compile_context>
chip_gen: v7x
topology: tpu7x:2x2x1
jax: 0.10.0
libtpu: 0.0.40
codegen_flags: <defaults>
</compile_context>

<pallas_src>
import functools

import jax
import jax.numpy as jnp
from jax.experimental import pallas as pl
from jax.experimental.pallas import tpu as pltpu


def _round_up(n, m):
    return ((n + m - 1) // m) * m


def _cdiv(a, b):
    return (a + b - 1) // b


def _pick_act_dtype():
    """bf16 EUP/VPU exists on v6e / v7x; keep the sigmoid math f32 elsewhere."""
    try:
        kind = jax.devices()[0].device_kind.lower()
    except Exception:
        return jnp.float32
    if ("v6" in kind) or ("v7" in kind) or ("tpu7" in kind):
        return jnp.bfloat16
    return jnp.float32


def _pick_bt(B, batch_tile):
    """Batch-tile selection (all multiples of 128)."""
    if B <= 256:
        return _round_up(max(B, 1), 128)            # single grid step
    if B <= 2 * batch_tile:
        return _round_up(_cdiv(B, 2), 128)          # exactly 2 steps -> both v7x TCs
    return batch_tile                               # many steps for very large B


def _sigmoid_bf16(z_f32, act_dtype):
    """sigmoid(z) -> bf16.  exp on the EUP in act_dtype (bf16 halves EUP pushes
    on v6e/v7x); denominator reciprocal via the cheap approx vrcp path."""
    e = jnp.exp(-(z_f32.astype(act_dtype)))
    denom = jnp.float32(1.0) + e.astype(jnp.float32)
    return pl.reciprocal(denom, approx=True).astype(jnp.bfloat16)


def mlp_kernel(x_ref, w1_ref, b1_ref, w2_ref, b2_ref, w3_ref, b3_ref, o_ref, *,
               act_dtype):
    """One batch tile of the 3-layer MLP: VPU layer-1, MXU bf16 layers 2-3."""
    x = x_ref[...]                                   # (bt, n_in) f32

    # ---- Layer 1: K = n_in (=3) contraction as broadcast FMAs on the VPU ----
    n_in = w1_ref.shape[0]
    acc = x[:, 0:1] * w1_ref[0:1, :]                 # (bt,1)*(1,640) -> (bt,640)
    for k in range(1, n_in):
        acc = acc + x[:, k:k + 1] * w1_ref[k:k + 1, :]
    h1 = _sigmoid_bf16(acc + b1_ref[...], act_dtype)   # (bt, 640) bf16

    # ---- Layer 2: 640 -> 256 (zero-padded) on the MXU, f32 accumulation ----
    z2 = jnp.dot(h1, w2_ref[...], preferred_element_type=jnp.float32) + b2_ref[...]
    h2 = _sigmoid_bf16(z2, act_dtype)                  # (bt, 256) bf16

    # ---- Layer 3: 256 -> 128-padded output (only col 0 is real) ----
    out = jnp.dot(h2, w3_ref[...], preferred_element_type=jnp.float32) + b3_ref[...]
    o_ref[...] = out.astype(o_ref.dtype)             # full, unmasked lane-dense store


def prepare_params(params):
    """One-time kernel-side parameter prep: bf16 casts + zero-padding to lane
    multiples (600->640, 200->256, 1->128).  Padded weight ROWS are zero, so the
    sigmoid(0)=0.5 values in padded activation columns contribute nothing."""
    w1, b1, w2, b2, w3, b3 = params
    n_in, h1_dim = w1.shape
    h2_dim = w2.shape[1]
    n_out = w3.shape[1]
    h1p = _round_up(h1_dim, 128)
    h2p = _round_up(h2_dim, 128)
    outp = _round_up(n_out, 128)

    w1p = jnp.zeros((n_in, h1p), jnp.float32).at[:, :h1_dim].set(w1.astype(jnp.float32))
    b1p = jnp.zeros((1, h1p), jnp.float32).at[:, :h1_dim].set(
        jnp.reshape(b1, (1, -1)).astype(jnp.float32))
    w2p = jnp.zeros((h1p, h2p), jnp.bfloat16).at[:h1_dim, :h2_dim].set(
        w2.astype(jnp.bfloat16))
    b2p = jnp.zeros((1, h2p), jnp.float32).at[:, :h2_dim].set(
        jnp.reshape(b2, (1, -1)).astype(jnp.float32))
    w3p = jnp.zeros((h2p, outp), jnp.bfloat16).at[:h2_dim, :n_out].set(
        w3.astype(jnp.bfloat16))
    b3p = jnp.zeros((1, outp), jnp.float32).at[:, :n_out].set(
        jnp.reshape(b3, (1, -1)).astype(jnp.float32))

    return {"w1": w1p, "b1": b1p, "w2": w2p, "b2": b2p, "w3": w3p, "b3": b3p,
            "n_in": n_in, "n_out": n_out}


def net_forward(x, prepared, *, batch_tile=1024):
    """Forward pass of Net using the prepared (padded / bf16) parameters."""
    w1p, b1p = prepared["w1"], prepared["b1"]
    w2p, b2p = prepared["w2"], prepared["b2"]
    w3p, b3p = prepared["w3"], prepared["b3"]
    n_in, n_out = prepared["n_in"], prepared["n_out"]
    h1p, h2p, outp = w1p.shape[1], w2p.shape[1], w3p.shape[1]

    B = x.shape[0]
    bt = _pick_bt(B, _round_up(batch_tile, 128))
    Bp = _round_up(B, bt)
    if Bp != B:
        x = jnp.pad(x, ((0, Bp - B), (0, 0)))        # pad batch in JAX, slice later

    act_dtype = _pick_act_dtype()
    kernel = functools.partial(mlp_kernel, act_dtype=act_dtype)

    def const_spec(shape):
        # Same block every step -> stays resident in VMEM, no re-DMA.
        return pl.BlockSpec(shape, lambda i: (0, 0))

    out_full = pl.pallas_call(
        kernel,
        out_shape=jax.ShapeDtypeStruct((Bp, outp), jnp.bfloat16),
        grid_spec=pltpu.PrefetchScalarGridSpec(
            num_scalar_prefetch=0,
            grid=(Bp // bt,),
            in_specs=[
                pl.BlockSpec((bt, n_in), lambda i: (i, 0)),   # x tile
                const_spec((n_in, h1p)),                      # w1 (f32, VPU layer)
                const_spec((1, h1p)),                         # b1
                const_spec((h1p, h2p)),                       # w2 (bf16)
                const_spec((1, h2p)),                         # b2
                const_spec((h2p, outp)),                      # w3 padded (bf16)
                const_spec((1, outp)),                        # b3 padded
            ],
            out_specs=pl.BlockSpec((bt, outp), lambda i: (i, 0)),
        ),
        compiler_params=pltpu.CompilerParams(
            dimension_semantics=("parallel",),
            vmem_limit_bytes=32 * 1024 * 1024,
        ),
    )(x.astype(jnp.float32), w1p, b1p, w2p, b2p, w3p, b3p)

    return out_full[:B, :n_out].astype(jnp.float32)


def init_params(key, nb_of_inputs=3, nb_of_outputs=1, h=(600, 200)):
    """Mimics nn.Linear's U(-1/sqrt(fan_in), 1/sqrt(fan_in)); weights stored (in, out)."""
    dims = [nb_of_inputs] + list(h) + [nb_of_outputs]
    params = []
    for i in range(len(dims) - 1):
        fan_in, fan_out = dims[i], dims[i + 1]
        key, kw, kb = jax.random.split(key, 3)
        bound = 1.0 / jnp.sqrt(fan_in)
        w = jax.random.uniform(kw, (fan_in, fan_out), jnp.float32, -bound, bound)
        b = jax.random.uniform(kb, (1, fan_out), jnp.float32, -bound, bound)
        params += [w, b]
    return tuple(params)


def net_forward_ref(x, params):
    """Pure-JAX f32 reference for correctness checking."""
    w1, b1, w2, b2, w3, b3 = params
    h1 = jax.nn.sigmoid(x @ w1 + b1)
    h2 = jax.nn.sigmoid(h1 @ w2 + b2)
    return h2 @ w3 + b3


if __name__ == "__main__":
    key = jax.random.PRNGKey(0)
    kx, kp = jax.random.split(key)

    params = init_params(kp, nb_of_inputs=3, nb_of_outputs=1, h=(600, 200))
    prepared = prepare_params(params)

    # B=20 exercises the single-step small-batch path; B=300 exercises batch
    # padding (300 -> 512) and the 2-step "parallel" grid (both v7x TCs).
    for B in (20, 300):
        x = jax.random.normal(jax.random.fold_in(kx, B), (B, 3), jnp.float32)
        out = jax.block_until_ready(net_forward(x, prepared, batch_tile=1024))
        ref = net_forward_ref(x, params)
        assert out.shape == (B, 1)
        # bf16 weights/activations in layers 2/3 and bf16 output -> relaxed tol.
        assert jnp.allclose(out, ref, atol=3e-2, rtol=3e-2), \
            f"Pallas output mismatch vs reference at B={B}"

    print("KERNEL_OK")
</pallas_src>

<mosaic_0001>
module attributes {stable_mosaic.version = 11 : i64} {
  func.func @mlp_kernel(%arg0: i32, %arg1: memref<128x3xf32, #tpu.memory_space<vmem>>, %arg2: memref<3x640xf32, #tpu.memory_space<vmem>>, %arg3: memref<1x640xf32, #tpu.memory_space<vmem>>, %arg4: memref<640x256xbf16, #tpu.memory_space<vmem>>, %arg5: memref<1x256xf32, #tpu.memory_space<vmem>>, %arg6: memref<256x128xbf16, #tpu.memory_space<vmem>>, %arg7: memref<1x128xf32, #tpu.memory_space<vmem>>, %arg8: memref<128x128xbf16, #tpu.memory_space<vmem>>) attributes {dimension_semantics = [#tpu.dimension_semantics<parallel>], iteration_bounds = array<i64: 1>, scalar_prefetch = 0 : i64, scratch_operands = 0 : i64, tpu.core_type = #tpu.core_type<tc>, window_params = [{transform_indices = @transform_0, window_bounds = array<i64: 128, 3>}, {pipeline_mode = #tpu.pipeline_mode<synchronous>, transform_indices = @transform_1, window_bounds = array<i64: 3, 640>}, {pipeline_mode = #tpu.pipeline_mode<synchronous>, transform_indices = @transform_2, window_bounds = array<i64: 1, 640>}, {pipeline_mode = #tpu.pipeline_mode<synchronous>, transform_indices = @transform_3, window_bounds = array<i64: 640, 256>}, {pipeline_mode = #tpu.pipeline_mode<synchronous>, transform_indices = @transform_4, window_bounds = array<i64: 1, 256>}, {pipeline_mode = #tpu.pipeline_mode<synchronous>, transform_indices = @transform_5, window_bounds = array<i64: 256, 128>}, {pipeline_mode = #tpu.pipeline_mode<synchronous>, transform_indices = @transform_6, window_bounds = array<i64: 1, 128>}, {transform_indices = @transform_7, window_bounds = array<i64: 128, 128>}]} {
    %c0 = arith.constant 0 : index
    %c0_0 = arith.constant 0 : index
    %0 = vector.load %arg1[%c0, %c0_0] : memref<128x3xf32, #tpu.memory_space<vmem>>, vector<128x3xf32>
    %1 = vector.extract_strided_slice %0 {offsets = [0, 0], sizes = [128, 1], strides = [1, 1]} : vector<128x3xf32> to vector<128x1xf32>
    %c0_1 = arith.constant 0 : index
    %c0_2 = arith.constant 0 : index
    %2 = vector.load %arg2[%c0_1, %c0_2] : memref<3x640xf32, #tpu.memory_space<vmem>>, vector<1x640xf32>
    %3 = vector.broadcast %1 : vector<128x1xf32> to vector<128x640xf32>
    %4 = vector.broadcast %2 : vector<1x640xf32> to vector<128x640xf32>
    %5 = arith.mulf %3, %4 : vector<128x640xf32>
    %6 = vector.extract_strided_slice %0 {offsets = [0, 1], sizes = [128, 1], strides = [1, 1]} : vector<128x3xf32> to vector<128x1xf32>
    %c1 = arith.constant 1 : index
    %c0_3 = arith.constant 0 : index
    %7 = vector.load %arg2[%c1, %c0_3] : memref<3x640xf32, #tpu.memory_space<vmem>>, vector<1x640xf32>
    %8 = vector.broadcast %6 : vector<128x1xf32> to vector<128x640xf32>
    %9 = vector.broadcast %7 : vector<1x640xf32> to vector<128x640xf32>
    %10 = arith.mulf %8, %9 : vector<128x640xf32>
    %11 = arith.addf %5, %10 : vector<128x640xf32>
    %12 = vector.extract_strided_slice %0 {offsets = [0, 2], sizes = [128, 1], strides = [1, 1]} : vector<128x3xf32> to vector<128x1xf32>
    %c2 = arith.constant 2 : index
    %c0_4 = arith.constant 0 : index
    %13 = vector.load %arg2[%c2, %c0_4] : memref<3x640xf32, #tpu.memory_space<vmem>>, vector<1x640xf32>
    %14 = vector.broadcast %12 : vector<128x1xf32> to vector<128x640xf32>
    %15 = vector.broadcast %13 : vector<1x640xf32> to vector<128x640xf32>
    %16 = arith.mulf %14, %15 : vector<128x640xf32>
    %17 = arith.addf %11, %16 : vector<128x640xf32>
    %c0_5 = arith.constant 0 : index
    %c0_6 = arith.constant 0 : index
    %18 = vector.load %arg3[%c0_5, %c0_6] : memref<1x640xf32, #tpu.memory_space<vmem>>, vector<1x640xf32>
    %19 = vector.broadcast %18 : vector<1x640xf32> to vector<128x640xf32>
    %20 = arith.addf %17, %19 : vector<128x640xf32>
    %cst = arith.constant 0.000000e+00 : f32
    %21 = vector.broadcast %cst : f32 to vector<128x640xf32>
    %22 = arith.subf %21, %20 : vector<128x640xf32>
    %23 = math.exp %22 : vector<128x640xf32>
    %cst_7 = arith.constant 1.000000e+00 : f32
    %24 = vector.broadcast %cst_7 : f32 to vector<128x640xf32>
    %25 = arith.addf %24, %23 : vector<128x640xf32>
    %26 = tpu.reciprocal %25 {approx = true} : vector<128x640xf32> -> vector<128x640xf32>
    %27 = arith.truncf %26 : vector<128x640xf32> to vector<128x640xbf16>
    %c0_8 = arith.constant 0 : index
    %c0_9 = arith.constant 0 : index
    %28 = vector.load %arg4[%c0_8, %c0_9] : memref<640x256xbf16, #tpu.memory_space<vmem>>, vector<640x256xbf16>
    %cst_10 = arith.constant dense<0.000000e+00> : vector<128x256xf32>
    %29 = tpu.matmul %27, %28, %cst_10 {dimension_numbers = #tpu.dot_dimension_numbers<[1], [0], [0], [1], [0, 0, 1, 1], [], []>} : vector<128x640xbf16>, vector<640x256xbf16>, vector<128x256xf32> -> vector<128x256xf32>
    %c0_11 = arith.constant 0 : index
    %c0_12 = arith.constant 0 : index
    %30 = vector.load %arg5[%c0_11, %c0_12] : memref<1x256xf32, #tpu.memory_space<vmem>>, vector<1x256xf32>
    %31 = vector.broadcast %30 : vector<1x256xf32> to vector<128x256xf32>
    %32 = arith.addf %29, %31 : vector<128x256xf32>
    %cst_13 = arith.constant 0.000000e+00 : f32
    %33 = vector.broadcast %cst_13 : f32 to vector<128x256xf32>
    %34 = arith.subf %33, %32 : vector<128x256xf32>
    %35 = math.exp %34 : vector<128x256xf32>
    %cst_14 = arith.constant 1.000000e+00 : f32
    %36 = vector.broadcast %cst_14 : f32 to vector<128x256xf32>
    %37 = arith.addf %36, %35 : vector<128x256xf32>
    %38 = tpu.reciprocal %37 {approx = true} : vector<128x256xf32> -> vector<128x256xf32>
    %39 = arith.truncf %38 : vector<128x256xf32> to vector<128x256xbf16>
    %c0_15 = arith.constant 0 : index
    %c0_16 = arith.constant 0 : index
    %40 = vector.load %arg6[%c0_15, %c0_16] : memref<256x128xbf16, #tpu.memory_space<vmem>>, vector<256x128xbf16>
    %cst_17 = arith.constant dense<0.000000e+00> : vector<128x128xf32>
    %41 = tpu.matmul %39, %40, %cst_17 {dimension_numbers = #tpu.dot_dimension_numbers<[1], [0], [0], [1], [0, 0, 1, 1], [], []>} : vector<128x256xbf16>, vector<256x128xbf16>, vector<128x128xf32> -> vector<128x128xf32>
    %c0_18 = arith.constant 0 : index
    %c0_19 = arith.constant 0 : index
    %42 = vector.load %arg7[%c0_18, %c0_19] : memref<1x128xf32, #tpu.memory_space<vmem>>, vector<1x128xf32>
    %43 = vector.broadcast %42 : vector<1x128xf32> to vector<128x128xf32>
    %44 = arith.addf %41, %43 : vector<128x128xf32>
    %45 = arith.truncf %44 : vector<128x128xf32> to vector<128x128xbf16>
    %c0_20 = arith.constant 0 : index
    %c0_21 = arith.constant 0 : index
    %46 = vector.load %arg8[%c0_20, %c0_21] : memref<128x128xbf16, #tpu.memory_space<vmem>>, vector<128x128xbf16>
    tpu.vector_store %arg8[%c0_20, %c0_21], %45 {strides = array<i32>} : memref<128x128xbf16, #tpu.memory_space<vmem>>, vector<128x128xbf16>,
    return
  }
  func.func @transform_0(%arg0: i32) -> (i32, i32) {
    %c0_i32 = arith.constant 0 : i32
    %c0_i32_0 = arith.constant 0 : i32
    return %arg0, %c0_i32 : i32, i32
  }
  func.func @transform_1(%arg0: i32) -> (i32, i32) {
    %c0_i32 = arith.constant 0 : i32
    %c0_i32_0 = arith.constant 0 : i32
    %c0_i32_1 = arith.constant 0 : i32
    return %c0_i32, %c0_i32_0 : i32, i32
  }
  func.func @transform_2(%arg0: i32) -> (i32, i32) {
    %c0_i32 = arith.constant 0 : i32
    %c0_i32_0 = arith.constant 0 : i32
    %c0_i32_1 = arith.constant 0 : i32
    return %c0_i32, %c0_i32_0 : i32, i32
  }
  func.func @transform_3(%arg0: i32) -> (i32, i32) {
    %c0_i32 = arith.constant 0 : i32
    %c0_i32_0 = arith.constant 0 : i32
    %c0_i32_1 = arith.constant 0 : i32
    return %c0_i32, %c0_i32_0 : i32, i32
  }
  func.func @transform_4(%arg0: i32) -> (i32, i32) {
    %c0_i32 = arith.constant 0 : i32
    %c0_i32_0 = arith.constant 0 : i32
    %c0_i32_1 = arith.constant 0 : i32
    return %c0_i32, %c0_i32_0 : i32, i32
  }
  func.func @transform_5(%arg0: i32) -> (i32, i32) {
    %c0_i32 = arith.constant 0 : i32
    %c0_i32_0 = arith.constant 0 : i32
    %c0_i32_1 = arith.constant 0 : i32
    return %c0_i32, %c0_i32_0 : i32, i32
  }
  func.func @transform_6(%arg0: i32) -> (i32, i32) {
    %c0_i32 = arith.constant 0 : i32
    %c0_i32_0 = arith.constant 0 : i32
    %c0_i32_1 = arith.constant 0 : i32
    return %c0_i32, %c0_i32_0 : i32, i32
  }
  func.func @transform_7(%arg0: i32) -> (i32, i32) {
    %c0_i32 = arith.constant 0 : i32
    %c0_i32_0 = arith.constant 0 : i32
    return %arg0, %c0_i32 : i32, i32
  }
}

</mosaic_0001>

<llo_original>
// kernel: tpu_custom_call.1
$region0: #{tpu_custom_call.1}
  #allocation0 [shape = 'u32[]', space=smem, size = 0x4, offset = 0x4, fixed_abs, tag = 'smem constant byte address 0x4 - core index']
  #allocation1 [shape = 'u32[144,128]{1,0:T(1,128)}', space=vmem, size = 0x12000, scoped, tag = 'internal scratch']
  %s0 = inlined_call_operand.vmem [shape: f32[128,3], index: 0, kind: input, shape index: {}]
  %s1 = inlined_call_operand.vmem [shape: f32[3,640], index: 1, kind: input, shape index: {}]
  %s2 = inlined_call_operand.hbm [shape: f32[1,640], index: 2, kind: input, shape index: {}]
  %s3 = inlined_call_operand.hbm [shape: bf16[640,256], index: 3, kind: input, shape index: {}]
  %s4 = inlined_call_operand.vmem [shape: f32[1,256], index: 4, kind: input, shape index: {}]
  %s5 = inlined_call_operand.vmem [shape: bf16[256,128], index: 5, kind: input, shape index: {}]
  %s6 = inlined_call_operand.vmem [shape: f32[1,128], index: 6, kind: input, shape index: {}]
  %s7 = inlined_call_operand.hbm [shape: bf16[128,128], index: 7, kind: output, shape index: {}]
  %s8 = sld [smem:[#allocation0]]
  $region46: #{tpu_custom_call.1} parent=0
    _
  %s10 = ssub.s32 1, %s8
  %s11 = scalar_select 0, %s10, %s8
  $region1: #{tpu_custom_call.1} parent=0
    #allocation2 [shape = 'u8[2560]{0}', space=vmem, size = 0xc00, scoped, tag = 'input window, operand 2, single buffered']
    #allocation3 [shape = 's32[1]{0}', space=sflag, size = 0x4, scoped, tag = 'scoped memory for tpu_custom_call.1']
    #allocation4 [shape = 's32[1]{0}', space=sflag, size = 0x4, scoped, tag = 'scoped memory for tpu_custom_call.1']
    #allocation5 [shape = 'u8[327680]{0}', space=vmem, size = 0x50000, scoped, tag = 'input window, operand 3, single buffered']
    #allocation6 [shape = 's32[1]{0}', space=sflag, size = 0x4, scoped, tag = 'scoped memory for tpu_custom_call.1']
    #allocation7 [shape = 'u8[32768]{0}', space=vmem, size = 0x8000, scoped, tag = 'output window, operand 0, single buffered']
    %12 = vsyncpa [#allocation3], 0
    %13 = vsyncpa [#allocation6], 0
    %14 = vsyncpa [#allocation4], 0
    // Predicated region
    $region2: #{tpu_custom_call.1} parent=1 // pred_check
      _
    $region3: #{tpu_custom_call.1} parent=1 // pred_check_branch
      %16 = sbr.rel (0) target = $region5
    $region4: #{tpu_custom_call.1} parent=1 // pred_region
      _
    $region5: #{tpu_custom_call.1} parent=1 // pred_fallthru
      _
    // Predicated region
    $region6: #{tpu_custom_call.1} parent=1 // pred_check
      _
    $region7: #{tpu_custom_call.1} parent=1 // pred_check_branch
      %18 = sbr.rel (0) target = $region9
    $region8: #{tpu_custom_call.1} parent=1 // pred_region
      _
    $region9: #{tpu_custom_call.1} parent=1 // pred_fallthru
      _
    // Predicated region
    $region10: #{tpu_custom_call.1} parent=1 // pred_check
      _
    $region11: #{tpu_custom_call.1} parent=1 // pred_check_branch
      %20 = sbr.rel (0) target = $region13
    $region12: #{tpu_custom_call.1} parent=1 // pred_region
      %s22 = ssub.s32 80, 80
      %23 = vsyncadd [#allocation3], %s22
      %s25 = sshll.u32 [#allocation2], 4
      %s26 = int_to_ptr.vmem [resolvable:$true] %s25
      %28 = dma.hbm_to_vmem [thread:$0]  %s2, 80, %s26, [#allocation3]
    $region13: #{tpu_custom_call.1} parent=1 // pred_fallthru
      _
    // Predicated region
    $region14: #{tpu_custom_call.1} parent=1 // pred_check
      _
    $region15: #{tpu_custom_call.1} parent=1 // pred_check_branch
      %30 = sbr.rel (0) target = $region17
    $region16: #{tpu_custom_call.1} parent=1 // pred_region
      %s32 = ssub.s32 10240, 10240
      %33 = vsyncadd [#allocation6], %s32
      %s34 = sshll.u32 [#allocation5], 4
      %s35 = int_to_ptr.vmem [resolvable:$true] %s34
      %40 = dma.hbm_to_vmem [thread:$0]  %s3, 10240, %s35, [#allocation6], 128, 128, 8
    $region17: #{tpu_custom_call.1} parent=1 // pred_fallthru
      _
    // Predicated region
    $region18: #{tpu_custom_call.1} parent=1 // pred_check
      _
    $region19: #{tpu_custom_call.1} parent=1 // pred_check_branch
      %42 = sbr.rel (0) target = $region21
    $region20: #{tpu_custom_call.1} parent=1 // pred_region
      _
    $region21: #{tpu_custom_call.1} parent=1 // pred_fallthru
      _
    // Predicated region
    $region22: #{tpu_custom_call.1} parent=1 // pred_check
      _
    $region23: #{tpu_custom_call.1} parent=1 // pred_check_branch
      %44 = sbr.rel (0) target = $region25
    $region24: #{tpu_custom_call.1} parent=1 // pred_region
      _
    $region25: #{tpu_custom_call.1} parent=1 // pred_fallthru
      _
    // Predicated region
    $region26: #{tpu_custom_call.1} parent=1 // pred_check
      _
    $region27: #{tpu_custom_call.1} parent=1 // pred_check_branch
      %46 = sbr.rel (0) target = $region29
    $region28: #{tpu_custom_call.1} parent=1 // pred_region
      _
    $region29: #{tpu_custom_call.1} parent=1 // pred_fallthru
      _
    // Predicated region
    $region30: #{tpu_custom_call.1} parent=1 // pred_check
      _
    $region31: #{tpu_custom_call.1} parent=1 // pred_check_branch
      %48 = sbr.rel (0) target = $region33
    $region32: #{tpu_custom_call.1} parent=1 // pred_region
      %49 = dma.done [#allocation3], 80
    $region33: #{tpu_custom_call.1} parent=1 // pred_fallthru
      _
    // Predicated region
    $region34: #{tpu_custom_call.1} parent=1 // pred_check
      _
    $region35: #{tpu_custom_call.1} parent=1 // pred_check_branch
      %51 = sbr.rel (0) target = $region37
    $region36: #{tpu_custom_call.1} parent=1 // pred_region
      %52 = dma.done [#allocation6], 10240
    $region37: #{tpu_custom_call.1} parent=1 // pred_fallthru
      _
    %v54 = vld [vmem:[%s0] sm:$0xff]
    %v55 = vld [vmem:[%s0 + $0x8] sm:$0xff]
    %v56 = vld [vmem:[%s0 + $0x10] sm:$0xff]
    %v57 = vld [vmem:[%s0 + $0x18] sm:$0xff]
    %v58 = vld [vmem:[%s0 + $0x20] sm:$0xff]
    %v59 = vld [vmem:[%s0 + $0x28] sm:$0xff]
    %v60 = vld [vmem:[%s0 + $0x30] sm:$0xff]
    %v61 = vld [vmem:[%s0 + $0x38] sm:$0xff]
    %v62 = vld [vmem:[%s0 + $0x40] sm:$0xff]
    %v63 = vld [vmem:[%s0 + $0x48] sm:$0xff]
    %v64 = vld [vmem:[%s0 + $0x50] sm:$0xff]
    %v65 = vld [vmem:[%s0 + $0x58] sm:$0xff]
    %v66 = vld [vmem:[%s0 + $0x60] sm:$0xff]
    %v67 = vld [vmem:[%s0 + $0x68] sm:$0xff]
    %v68 = vld [vmem:[%s0 + $0x70] sm:$0xff]
    %v69 = vld [vmem:[%s0 + $0x78] sm:$0xff]
    %v70 = vld [vmem:[%s1] ss:$4 sm:$0x1f]
    %72 = vset.pattern.permute.xlu0 0
    %73 = vperm.xlu0 %72, %v54
    %v74 = vpop.permute.xlu0 %73
    %77 = vset.pattern.permute.xlu0 0
    %78 = vperm.xlu0 %77, %v55
    %v79 = vpop.permute.xlu0 %78
    %82 = vset.pattern.permute.xlu0 0
    %83 = vperm.xlu0 %82, %v56
    %v84 = vpop.permute.xlu0 %83
    %87 = vset.pattern.permute.xlu0 0
    %88 = vperm.xlu0 %87, %v57
    %v89 = vpop.permute.xlu0 %88
    %92 = vset.pattern.permute.xlu0 0
    %93 = vperm.xlu0 %92, %v58
    %v94 = vpop.permute.xlu0 %93
    %97 = vset.pattern.permute.xlu0 0
    %98 = vperm.xlu0 %97, %v59
    %v99 = vpop.permute.xlu0 %98
    %102 = vset.pattern.permute.xlu0 0
    %103 = vperm.xlu0 %102, %v60
    %v104 = vpop.permute.xlu0 %103
    %107 = vset.pattern.permute.xlu0 0
    %108 = vperm.xlu0 %107, %v61
    %v109 = vpop.permute.xlu0 %108
    %112 = vset.pattern.permute.xlu0 0
    %113 = vperm.xlu0 %112, %v62
    %v114 = vpop.permute.xlu0 %113
    %117 = vset.pattern.permute.xlu0 0
    %118 = vperm.xlu0 %117, %v63
    %v119 = vpop.permute.xlu0 %118
    %122 = vset.pattern.permute.xlu0 0
    %123 = vperm.xlu0 %122, %v64
    %v124 = vpop.permute.xlu0 %123
    %127 = vset.pattern.permute.xlu0 0
    %128 = vperm.xlu0 %127, %v65
    %v129 = vpop.permute.xlu0 %128
    %132 = vset.pattern.permute.xlu0 0
    %133 = vperm.xlu0 %132, %v66
    %v134 = vpop.permute.xlu0 %133
    %137 = vset.pattern.permute.xlu0 0
    %138 = vperm.xlu0 %137, %v67
    %v139 = vpop.permute.xlu0 %138
    %142 = vset.pattern.permute.xlu0 0
    %143 = vperm.xlu0 %142, %v68
    %v144 = vpop.permute.xlu0 %143
    %147 = vset.pattern.permute.xlu0 0
    %148 = vperm.xlu0 %147, %v69
    %v149 = vpop.permute.xlu0 %148
    %v152 = vlaneseq
    %v153 = vshrl.u32 %v152, 7
    %v154 = vsub.s32 0, %v153
    %v155 = vrot.slane %v70, %v154
    %v156 = vlaneseq
    %v157 = vshrl.u32 %v156, 7
    %v158 = vsub.s32 1, %v157
    %v159 = vrot.slane %v70, %v158
    %v160 = vlaneseq
    %v161 = vshrl.u32 %v160, 7
    %v162 = vsub.s32 2, %v161
    %v163 = vrot.slane %v70, %v162
    %v164 = vlaneseq
    %v165 = vshrl.u32 %v164, 7
    %v166 = vsub.s32 3, %v165
    %v167 = vrot.slane %v70, %v166
    %v168 = vlaneseq
    %v169 = vshrl.u32 %v168, 7
    %v170 = vsub.s32 4, %v169
    %v171 = vrot.slane %v70, %v170
    %v177 = vmul.f32 %v74, %v155
    %v178 = vmul.f32 %v74, %v159
    %v179 = vmul.f32 %v74, %v163
    %v180 = vmul.f32 %v74, %v167
    %v181 = vmul.f32 %v74, %v171
    %v182 = vmul.f32 %v79, %v155
    %v183 = vmul.f32 %v79, %v159
    %v184 = vmul.f32 %v79, %v163
    %v185 = vmul.f32 %v79, %v167
    %v186 = vmul.f32 %v79, %v171
    %v187 = vmul.f32 %v84, %v155
    %v188 = vmul.f32 %v84, %v159
    %v189 = vmul.f32 %v84, %v163
    %v190 = vmul.f32 %v84, %v167
    %v191 = vmul.f32 %v84, %v171
    %v192 = vmul.f32 %v89, %v155
    %v193 = vmul.f32 %v89, %v159
    %v194 = vmul.f32 %v89, %v163
    %v195 = vmul.f32 %v89, %v167
    %v196 = vmul.f32 %v89, %v171
    %v197 = vmul.f32 %v94, %v155
    %v198 = vmul.f32 %v94, %v159
    %v199 = vmul.f32 %v94, %v163
    %v200 = vmul.f32 %v94, %v167
    %v201 = vmul.f32 %v94, %v171
    %v202 = vmul.f32 %v99, %v155
    %v203 = vmul.f32 %v99, %v159
    %v204 = vmul.f32 %v99, %v163
    %v205 = vmul.f32 %v99, %v167
    %v206 = vmul.f32 %v99, %v171
    %v207 = vmul.f32 %v104, %v155
    %v208 = vmul.f32 %v104, %v159
    %v209 = vmul.f32 %v104, %v163
    %v210 = vmul.f32 %v104, %v167
    %v211 = vmul.f32 %v104, %v171
    %v212 = vmul.f32 %v109, %v155
    %v213 = vmul.f32 %v109, %v159
    %v214 = vmul.f32 %v109, %v163
    %v215 = vmul.f32 %v109, %v167
    %v216 = vmul.f32 %v109, %v171
    %v217 = vmul.f32 %v114, %v155
    %v218 = vmul.f32 %v114, %v159
    %v219 = vmul.f32 %v114, %v163
    %v220 = vmul.f32 %v114, %v167
    %v221 = vmul.f32 %v114, %v171
    %v222 = vmul.f32 %v119, %v155
    %v223 = vmul.f32 %v119, %v159
    %v224 = vmul.f32 %v119, %v163
    %v225 = vmul.f32 %v119, %v167
    %v226 = vmul.f32 %v119, %v171
    %v227 = vmul.f32 %v124, %v155
    %v228 = vmul.f32 %v124, %v159
    %v229 = vmul.f32 %v124, %v163
    %v230 = vmul.f32 %v124, %v167
    %v231 = vmul.f32 %v124, %v171
    %v232 = vmul.f32 %v129, %v155
    %v233 = vmul.f32 %v129, %v159
    %v234 = vmul.f32 %v129, %v163
    %v235 = vmul.f32 %v129, %v167
    %v236 = vmul.f32 %v129, %v171
    %v237 = vmul.f32 %v134, %v155
    %v238 = vmul.f32 %v134, %v159
    %v239 = vmul.f32 %v134, %v163
    %v240 = vmul.f32 %v134, %v167
    %v241 = vmul.f32 %v134, %v171
    %v242 = vmul.f32 %v139, %v155
    %v243 = vmul.f32 %v139, %v159
    %v244 = vmul.f32 %v139, %v163
    %v245 = vmul.f32 %v139, %v167
    %v246 = vmul.f32 %v139, %v171
    %v247 = vmul.f32 %v144, %v155
    %v248 = vmul.f32 %v144, %v159
    %v249 = vmul.f32 %v144, %v163
    %v250 = vmul.f32 %v144, %v167
    %v251 = vmul.f32 %v144, %v171
    %v252 = vmul.f32 %v149, %v155
    %v253 = vmul.f32 %v149, %v159
    %v254 = vmul.f32 %v149, %v163
    %v255 = vmul.f32 %v149, %v167
    %v256 = vmul.f32 %v149, %v171
    %s257 = scalar_lea.vmem %s1, 1
    %v258 = vld [vmem:[%s257] ss:$4 sm:$0x1f]
    %259 = vset.pattern.permute.xlu0 1
    %260 = vperm.xlu0 %259, %v54
    %v261 = vpop.permute.xlu0 %260
    %263 = vset.pattern.permute.xlu0 1
    %264 = vperm.xlu0 %263, %v55
    %v265 = vpop.permute.xlu0 %264
    %267 = vset.pattern.permute.xlu0 1
    %268 = vperm.xlu0 %267, %v56
    %v269 = vpop.permute.xlu0 %268
    %271 = vset.pattern.permute.xlu0 1
    %272 = vperm.xlu0 %271, %v57
    %v273 = vpop.permute.xlu0 %272
    %275 = vset.pattern.permute.xlu0 1
    %276 = vperm.xlu0 %275, %v58
    %v277 = vpop.permute.xlu0 %276
    %279 = vset.pattern.permute.xlu0 1
    %280 = vperm.xlu0 %279, %v59
    %v281 = vpop.permute.xlu0 %280
    %283 = vset.pattern.permute.xlu0 1
    %284 = vperm.xlu0 %283, %v60
    %v285 = vpop.permute.xlu0 %284
    %287 = vset.pattern.permute.xlu0 1
    %288 = vperm.xlu0 %287, %v61
    %v289 = vpop.permute.xlu0 %288
    %291 = vset.pattern.permute.xlu0 1
    %292 = vperm.xlu0 %291, %v62
    %v293 = vpop.permute.xlu0 %292
    %295 = vset.pattern.permute.xlu0 1
    %296 = vperm.xlu0 %295, %v63
    %v297 = vpop.permute.xlu0 %296
    %299 = vset.pattern.permute.xlu0 1
    %300 = vperm.xlu0 %299, %v64
    %v301 = vpop.permute.xlu0 %300
    %303 = vset.pattern.permute.xlu0 1
    %304 = vperm.xlu0 %303, %v65
    %v305 = vpop.permute.xlu0 %304
    %307 = vset.pattern.permute.xlu0 1
    %308 = vperm.xlu0 %307, %v66
    %v309 = vpop.permute.xlu0 %308
    %311 = vset.pattern.permute.xlu0 1
    %312 = vperm.xlu0 %311, %v67
    %v313 = vpop.permute.xlu0 %312
    %315 = vset.pattern.permute.xlu0 1
    %316 = vperm.xlu0 %315, %v68
    %v317 = vpop.permute.xlu0 %316
    %319 = vset.pattern.permute.xlu0 1
    %320 = vperm.xlu0 %319, %v69
    %v321 = vpop.permute.xlu0 %320
    %v324 = vlaneseq
    %v325 = vshrl.u32 %v324, 7
    %v326 = vsub.s32 0, %v325
    %v327 = vrot.slane %v258, %v326
    %v328 = vlaneseq
    %v329 = vshrl.u32 %v328, 7
    %v330 = vsub.s32 1, %v329
    %v331 = vrot.slane %v258, %v330
    %v332 = vlaneseq
    %v333 = vshrl.u32 %v332, 7
    %v334 = vsub.s32 2, %v333
    %v335 = vrot.slane %v258, %v334
    %v336 = vlaneseq
    %v337 = vshrl.u32 %v336, 7
    %v338 = vsub.s32 3, %v337
    %v339 = vrot.slane %v258, %v338
    %v340 = vlaneseq
    %v341 = vshrl.u32 %v340, 7
    %v342 = vsub.s32 4, %v341
    %v343 = vrot.slane %v258, %v342
    %v349 = vmul.f32 %v261, %v327
    %v350 = vmul.f32 %v261, %v331
    %v351 = vmul.f32 %v261, %v335
    %v352 = vmul.f32 %v261, %v339
    %v353 = vmul.f32 %v261, %v343
    %v354 = vmul.f32 %v265, %v327
    %v355 = vmul.f32 %v265, %v331
    %v356 = vmul.f32 %v265, %v335
    %v357 = vmul.f32 %v265, %v339
    %v358 = vmul.f32 %v265, %v343
    %v359 = vmul.f32 %v269, %v327
    %v360 = vmul.f32 %v269, %v331
    %v361 = vmul.f32 %v269, %v335
    %v362 = vmul.f32 %v269, %v339
    %v363 = vmul.f32 %v269, %v343
    %v364 = vmul.f32 %v273, %v327
    %v365 = vmul.f32 %v273, %v331
    %v366 = vmul.f32 %v273, %v335
    %v367 = vmul.f32 %v273, %v339
    %v368 = vmul.f32 %v273, %v343
    %v369 = vmul.f32 %v277, %v327
    %v370 = vmul.f32 %v277, %v331
    %v371 = vmul.f32 %v277, %v335
    %v372 = vmul.f32 %v277, %v339
    %v373 = vmul.f32 %v277, %v343
    %v374 = vmul.f32 %v281, %v327
    %v375 = vmul.f32 %v281, %v331
    %v376 = vmul.f32 %v281, %v335
    %v377 = vmul.f32 %v281, %v339
    %v378 = vmul.f32 %v281, %v343
    %v379 = vmul.f32 %v285, %v327
    %v380 = vmul.f32 %v285, %v331
    %v381 = vmul.f32 %v285, %v335
    %v382 = vmul.f32 %v285, %v339
    %v383 = vmul.f32 %v285, %v343
    %v384 = vmul.f32 %v289, %v327
    %v385 = vmul.f32 %v289, %v331
    %v386 = vmul.f32 %v289, %v335
    %v387 = vmul.f32 %v289, %v339
    %v388 = vmul.f32 %v289, %v343
    %v389 = vmul.f32 %v293, %v327
    %v390 = vmul.f32 %v293, %v331
    %v391 = vmul.f32 %v293, %v335
    %v392 = vmul.f32 %v293, %v339
    %v393 = vmul.f32 %v293, %v343
    %v394 = vmul.f32 %v297, %v327
    %v395 = vmul.f32 %v297, %v331
    %v396 = vmul.f32 %v297, %v335
    %v397 = vmul.f32 %v297, %v339
    %v398 = vmul.f32 %v297, %v343
    %v399 = vmul.f32 %v301, %v327
    %v400 = vmul.f32 %v301, %v331
    %v401 = vmul.f32 %v301, %v335
    %v402 = vmul.f32 %v301, %v339
    %v403 = vmul.f32 %v301, %v343
    %v404 = vmul.f32 %v305, %v327
    %v405 = vmul.f32 %v305, %v331
    %v406 = vmul.f32 %v305, %v335
    %v407 = vmul.f32 %v305, %v339
    %v408 = vmul.f32 %v305, %v343
    %v409 = vmul.f32 %v309, %v327
    %v410 = vmul.f32 %v309, %v331
    %v411 = vmul.f32 %v309, %v335
    %v412 = vmul.f32 %v309, %v339
    %v413 = vmul.f32 %v309, %v343
    %v414 = vmul.f32 %v313, %v327
    %v415 = vmul.f32 %v313, %v331
    %v416 = vmul.f32 %v313, %v335
    %v417 = vmul.f32 %v313, %v339
    %v418 = vmul.f32 %v313, %v343
    %v419 = vmul.f32 %v317, %v327
    %v420 = vmul.f32 %v317, %v331
    %v421 = vmul.f32 %v317, %v335
    %v422 = vmul.f32 %v317, %v339
    %v423 = vmul.f32 %v317, %v343
    %v424 = vmul.f32 %v321, %v327
    %v425 = vmul.f32 %v321, %v331
    %v426 = vmul.f32 %v321, %v335
    %v427 = vmul.f32 %v321, %v339
    %v428 = vmul.f32 %v321, %v343
    %v429 = vadd.f32 %v177, %v349
    %v430 = vadd.f32 %v178, %v350
    %v431 = vadd.f32 %v179, %v351
    %v432 = vadd.f32 %v180, %v352
    %v433 = vadd.f32 %v181, %v353
    %v434 = vadd.f32 %v182, %v354
    %v435 = vadd.f32 %v183, %v355
    %v436 = vadd.f32 %v184, %v356
    %v437 = vadd.f32 %v185, %v357
    %v438 = vadd.f32 %v186, %v358
    %v439 = vadd.f32 %v187, %v359
    %v440 = vadd.f32 %v188, %v360
    %v441 = vadd.f32 %v189, %v361
    %v442 = vadd.f32 %v190, %v362
    %v443 = vadd.f32 %v191, %v363
    %v444 = vadd.f32 %v192, %v364
    %v445 = vadd.f32 %v193, %v365
    %v446 = vadd.f32 %v194, %v366
    %v447 = vadd.f32 %v195, %v367
    %v448 = vadd.f32 %v196, %v368
    %v449 = vadd.f32 %v197, %v369
    %v450 = vadd.f32 %v198, %v370
    %v451 = vadd.f32 %v199, %v371
    %v452 = vadd.f32 %v200, %v372
    %v453 = vadd.f32 %v201, %v373
    %v454 = vadd.f32 %v202, %v374
    %v455 = vadd.f32 %v203, %v375
    %v456 = vadd.f32 %v204, %v376
    %v457 = vadd.f32 %v205, %v377
    %v458 = vadd.f32 %v206, %v378
    %v459 = vadd.f32 %v207, %v379
    %v460 = vadd.f32 %v208, %v380
    %v461 = vadd.f32 %v209, %v381
    %v462 = vadd.f32 %v210, %v382
    %v463 = vadd.f32 %v211, %v383
    %v464 = vadd.f32 %v212, %v384
    %v465 = vadd.f32 %v213, %v385
    %v466 = vadd.f32 %v214, %v386
    %v467 = vadd.f32 %v215, %v387
    %v468 = vadd.f32 %v216, %v388
    %v469 = vadd.f32 %v217, %v389
    %v470 = vadd.f32 %v218, %v390
    %v471 = vadd.f32 %v219, %v391
    %v472 = vadd.f32 %v220, %v392
    %v473 = vadd.f32 %v221, %v393
    %v474 = vadd.f32 %v222, %v394
    %v475 = vadd.f32 %v223, %v395
    %v476 = vadd.f32 %v224, %v396
    %v477 = vadd.f32 %v225, %v397
    %v478 = vadd.f32 %v226, %v398
    %v479 = vadd.f32 %v227, %v399
    %v480 = vadd.f32 %v228, %v400
    %v481 = vadd.f32 %v229, %v401
    %v482 = vadd.f32 %v230, %v402
    %v483 = vadd.f32 %v231, %v403
    %v484 = vadd.f32 %v232, %v404
    %v485 = vadd.f32 %v233, %v405
    %v486 = vadd.f32 %v234, %v406
    %v487 = vadd.f32 %v235, %v407
    %v488 = vadd.f32 %v236, %v408
    %v489 = vadd.f32 %v237, %v409
    %v490 = vadd.f32 %v238, %v410
    %v491 = vadd.f32 %v239, %v411
    %v492 = vadd.f32 %v240, %v412
    %v493 = vadd.f32 %v241, %v413
    %v494 = vadd.f32 %v242, %v414
    %v495 = vadd.f32 %v243, %v415
    %v496 = vadd.f32 %v244, %v416
    %v497 = vadd.f32 %v245, %v417
    %v498 = vadd.f32 %v246, %v418
    %v499 = vadd.f32 %v247, %v419
    %v500 = vadd.f32 %v248, %v420
    %v501 = vadd.f32 %v249, %v421
    %v502 = vadd.f32 %v250, %v422
    %v503 = vadd.f32 %v251, %v423
    %v504 = vadd.f32 %v252, %v424
    %v505 = vadd.f32 %v253, %v425
    %v506 = vadd.f32 %v254, %v426
    %v507 = vadd.f32 %v255, %v427
    %v508 = vadd.f32 %v256, %v428
    %s509 = scalar_lea.vmem %s1, 2
    %v510 = vld [vmem:[%s509] ss:$4 sm:$0x1f]
    %511 = vset.pattern.permute.xlu0 2
    %512 = vperm.xlu0 %511, %v54
    %v513 = vpop.permute.xlu0 %512
    %515 = vset.pattern.permute.xlu0 2
    %516 = vperm.xlu0 %515, %v55
    %v517 = vpop.permute.xlu0 %516
    %519 = vset.pattern.permute.xlu0 2
    %520 = vperm.xlu0 %519, %v56
    %v521 = vpop.permute.xlu0 %520
    %523 = vset.pattern.permute.xlu0 2
    %524 = vperm.xlu0 %523, %v57
    %v525 = vpop.permute.xlu0 %524
    %527 = vset.pattern.permute.xlu0 2
    %528 = vperm.xlu0 %527, %v58
    %v529 = vpop.permute.xlu0 %528
    %531 = vset.pattern.permute.xlu0 2
    %532 = vperm.xlu0 %531, %v59
    %v533 = vpop.permute.xlu0 %532
    %535 = vset.pattern.permute.xlu0 2
    %536 = vperm.xlu0 %535, %v60
    %v537 = vpop.permute.xlu0 %536
    %539 = vset.pattern.permute.xlu0 2
    %540 = vperm.xlu0 %539, %v61
    %v541 = vpop.permute.xlu0 %540
    %543 = vset.pattern.permute.xlu0 2
    %544 = vperm.xlu0 %543, %v62
    %v545 = vpop.permute.xlu0 %544
    %547 = vset.pattern.permute.xlu0 2
    %548 = vperm.xlu0 %547, %v63
    %v549 = vpop.permute.xlu0 %548
    %551 = vset.pattern.permute.xlu0 2
    %552 = vperm.xlu0 %551, %v64
    %v553 = vpop.permute.xlu0 %552
    %555 = vset.pattern.permute.xlu0 2
    %556 = vperm.xlu0 %555, %v65
    %v557 = vpop.permute.xlu0 %556
    %559 = vset.pattern.permute.xlu0 2
    %560 = vperm.xlu0 %559, %v66
    %v561 = vpop.permute.xlu0 %560
    %563 = vset.pattern.permute.xlu0 2
    %564 = vperm.xlu0 %563, %v67
    %v565 = vpop.permute.xlu0 %564
    %567 = vset.pattern.permute.xlu0 2
    %568 = vperm.xlu0 %567, %v68
    %v569 = vpop.permute.xlu0 %568
    %571 = vset.pattern.permute.xlu0 2
    %572 = vperm.xlu0 %571, %v69
    %v573 = vpop.permute.xlu0 %572
    %v576 = vlaneseq
    %v577 = vshrl.u32 %v576, 7
    %v578 = vsub.s32 0, %v577
    %v579 = vrot.slane %v510, %v578
    %v580 = vlaneseq
    %v581 = vshrl.u32 %v580, 7
    %v582 = vsub.s32 1, %v581
    %v583 = vrot.slane %v510, %v582
    %v584 = vlaneseq
    %v585 = vshrl.u32 %v584, 7
    %v586 = vsub.s32 2, %v585
    %v587 = vrot.slane %v510, %v586
    %v588 = vlaneseq
    %v589 = vshrl.u32 %v588, 7
    %v590 = vsub.s32 3, %v589
    %v591 = vrot.slane %v510, %v590
    %v592 = vlaneseq
    %v593 = vshrl.u32 %v592, 7
    %v594 = vsub.s32 4, %v593
    %v595 = vrot.slane %v510, %v594
    %v601 = vmul.f32 %v513, %v579
    %v602 = vmul.f32 %v513, %v583
    %v603 = vmul.f32 %v513, %v587
    %v604 = vmul.f32 %v513, %v591
    %v605 = vmul.f32 %v513, %v595
    %v606 = vmul.f32 %v517, %v579
    %v607 = vmul.f32 %v517, %v583
    %v608 = vmul.f32 %v517, %v587
    %v609 = vmul.f32 %v517, %v591
    %v610 = vmul.f32 %v517, %v595
    %v611 = vmul.f32 %v521, %v579
    %v612 = vmul.f32 %v521, %v583
    %v613 = vmul.f32 %v521, %v587
    %v614 = vmul.f32 %v521, %v591
    %v615 = vmul.f32 %v521, %v595
    %v616 = vmul.f32 %v525, %v579
    %v617 = vmul.f32 %v525, %v583
    %v618 = vmul.f32 %v525, %v587
    %v619 = vmul.f32 %v525, %v591
    %v620 = vmul.f32 %v525, %v595
    %v621 = vmul.f32 %v529, %v579
    %v622 = vmul.f32 %v529, %v583
    %v623 = vmul.f32 %v529, %v587
    %v624 = vmul.f32 %v529, %v591
    %v625 = vmul.f32 %v529, %v595
    %v626 = vmul.f32 %v533, %v579
    %v627 = vmul.f32 %v533, %v583
    %v628 = vmul.f32 %v533, %v587
    %v629 = vmul.f32 %v533, %v591
    %v630 = vmul.f32 %v533, %v595
    %v631 = vmul.f32 %v537, %v579
    %v632 = vmul.f32 %v537, %v583
    %v633 = vmul.f32 %v537, %v587
    %v634 = vmul.f32 %v537, %v591
    %v635 = vmul.f32 %v537, %v595
    %v636 = vmul.f32 %v541, %v579
    %v637 = vmul.f32 %v541, %v583
    %v638 = vmul.f32 %v541, %v587
    %v639 = vmul.f32 %v541, %v591
    %v640 = vmul.f32 %v541, %v595
    %v641 = vmul.f32 %v545, %v579
    %v642 = vmul.f32 %v545, %v583
    %v643 = vmul.f32 %v545, %v587
    %v644 = vmul.f32 %v545, %v591
    %v645 = vmul.f32 %v545, %v595
    %v646 = vmul.f32 %v549, %v579
    %v647 = vmul.f32 %v549, %v583
    %v648 = vmul.f32 %v549, %v587
    %v649 = vmul.f32 %v549, %v591
    %v650 = vmul.f32 %v549, %v595
    %v651 = vmul.f32 %v553, %v579
    %v652 = vmul.f32 %v553, %v583
    %v653 = vmul.f32 %v553, %v587
    %v654 = vmul.f32 %v553, %v591
    %v655 = vmul.f32 %v553, %v595
    %v656 = vmul.f32 %v557, %v579
    %v657 = vmul.f32 %v557, %v583
    %v658 = vmul.f32 %v557, %v587
    %v659 = vmul.f32 %v557, %v591
    %v660 = vmul.f32 %v557, %v595
    %v661 = vmul.f32 %v561, %v579
    %v662 = vmul.f32 %v561, %v583
    %v663 = vmul.f32 %v561, %v587
    %v664 = vmul.f32 %v561, %v591
    %v665 = vmul.f32 %v561, %v595
    %v666 = vmul.f32 %v565, %v579
    %v667 = vmul.f32 %v565, %v583
    %v668 = vmul.f32 %v565, %v587
    %v669 = vmul.f32 %v565, %v591
    %v670 = vmul.f32 %v565, %v595
    %v671 = vmul.f32 %v569, %v579
    %v672 = vmul.f32 %v569, %v583
    %v673 = vmul.f32 %v569, %v587
    %v674 = vmul.f32 %v569, %v591
    %v675 = vmul.f32 %v569, %v595
    %v676 = vmul.f32 %v573, %v579
    %v677 = vmul.f32 %v573, %v583
    %v678 = vmul.f32 %v573, %v587
    %v679 = vmul.f32 %v573, %v591
    %v680 = vmul.f32 %v573, %v595
    %v681 = vadd.f32 %v429, %v601
    %v682 = vadd.f32 %v430, %v602
    %v683 = vadd.f32 %v431, %v603
    %v684 = vadd.f32 %v432, %v604
    %v685 = vadd.f32 %v433, %v605
    %v686 = vadd.f32 %v434, %v606
    %v687 = vadd.f32 %v435, %v607
    %v688 = vadd.f32 %v436, %v608
    %v689 = vadd.f32 %v437, %v609
    %v690 = vadd.f32 %v438, %v610
    %v691 = vadd.f32 %v439, %v611
    %v692 = vadd.f32 %v440, %v612
    %v693 = vadd.f32 %v441, %v613
    %v694 = vadd.f32 %v442, %v614
    %v695 = vadd.f32 %v443, %v615
    %v696 = vadd.f32 %v444, %v616
    %v697 = vadd.f32 %v445, %v617
    %v698 = vadd.f32 %v446, %v618
    %v699 = vadd.f32 %v447, %v619
    %v700 = vadd.f32 %v448, %v620
    %v701 = vadd.f32 %v449, %v621
    %v702 = vadd.f32 %v450, %v622
    %v703 = vadd.f32 %v451, %v623
    %v704 = vadd.f32 %v452, %v624
    %v705 = vadd.f32 %v453, %v625
    %v706 = vadd.f32 %v454, %v626
    %v707 = vadd.f32 %v455, %v627
    %v708 = vadd.f32 %v456, %v628
    %v709 = vadd.f32 %v457, %v629
    %v710 = vadd.f32 %v458, %v630
    %v711 = vadd.f32 %v459, %v631
    %v712 = vadd.f32 %v460, %v632
    %v713 = vadd.f32 %v461, %v633
    %v714 = vadd.f32 %v462, %v634
    %v715 = vadd.f32 %v463, %v635
    %v716 = vadd.f32 %v464, %v636
    %v717 = vadd.f32 %v465, %v637
    %v718 = vadd.f32 %v466, %v638
    %v719 = vadd.f32 %v467, %v639
    %v720 = vadd.f32 %v468, %v640
    %v721 = vadd.f32 %v469, %v641
    %v722 = vadd.f32 %v470, %v642
    %v723 = vadd.f32 %v471, %v643
    %v724 = vadd.f32 %v472, %v644
    %v725 = vadd.f32 %v473, %v645
    %v726 = vadd.f32 %v474, %v646
    %v727 = vadd.f32 %v475, %v647
    %v728 = vadd.f32 %v476, %v648
    %v729 = vadd.f32 %v477, %v649
    %v730 = vadd.f32 %v478, %v650
    %v731 = vadd.f32 %v479, %v651
    %v732 = vadd.f32 %v480, %v652
    %v733 = vadd.f32 %v481, %v653
    %v734 = vadd.f32 %v482, %v654
    %v735 = vadd.f32 %v483, %v655
    %v736 = vadd.f32 %v484, %v656
    %v737 = vadd.f32 %v485, %v657
    %v738 = vadd.f32 %v486, %v658
    %v739 = vadd.f32 %v487, %v659
    %v740 = vadd.f32 %v488, %v660
    %v741 = vadd.f32 %v489, %v661
    %v742 = vadd.f32 %v490, %v662
    %v743 = vadd.f32 %v491, %v663
    %v744 = vadd.f32 %v492, %v664
    %v745 = vadd.f32 %v493, %v665
    %v746 = vadd.f32 %v494, %v666
    %v747 = vadd.f32 %v495, %v667
    %v748 = vadd.f32 %v496, %v668
    %v749 = vadd.f32 %v497, %v669
    %v750 = vadd.f32 %v498, %v670
    %v751 = vadd.f32 %v499, %v671
    %v752 = vadd.f32 %v500, %v672
    %v753 = vadd.f32 %v501, %v673
    %v754 = vadd.f32 %v502, %v674
    %v755 = vadd.f32 %v503, %v675
    %v756 = vadd.f32 %v504, %v676
    %v757 = vadd.f32 %v505, %v677
    %v758 = vadd.f32 %v506, %v678
    %v759 = vadd.f32 %v507, %v679
    %v760 = vadd.f32 %v508, %v680
    %v761 = vld [vmem:[#allocation2] sm:$0x1f]
    %v763 = vlaneseq
    %v764 = vshrl.u32 %v763, 7
    %v765 = vsub.s32 0, %v764
    %v766 = vrot.slane %v761, %v765
    %v767 = vlaneseq
    %v768 = vshrl.u32 %v767, 7
    %v769 = vsub.s32 1, %v768
    %v770 = vrot.slane %v761, %v769
    %v771 = vlaneseq
    %v772 = vshrl.u32 %v771, 7
    %v773 = vsub.s32 2, %v772
    %v774 = vrot.slane %v761, %v773
    %v775 = vlaneseq
    %v776 = vshrl.u32 %v775, 7
    %v777 = vsub.s32 3, %v776
    %v778 = vrot.slane %v761, %v777
    %v779 = vlaneseq
    %v780 = vshrl.u32 %v779, 7
    %v781 = vsub.s32 4, %v780
    %v782 = vrot.slane %v761, %v781
    %v788 = vadd.f32 %v681, %v766
    %v789 = vadd.f32 %v682, %v770
    %v790 = vadd.f32 %v683, %v774
    %v791 = vadd.f32 %v684, %v778
    %v792 = vadd.f32 %v685, %v782
    %v793 = vadd.f32 %v686, %v766
    %v794 = vadd.f32 %v687, %v770
    %v795 = vadd.f32 %v688, %v774
    %v796 = vadd.f32 %v689, %v778
    %v797 = vadd.f32 %v690, %v782
    %v798 = vadd.f32 %v691, %v766
    %v799 = vadd.f32 %v692, %v770
    %v800 = vadd.f32 %v693, %v774
    %v801 = vadd.f32 %v694, %v778
    %v802 = vadd.f32 %v695, %v782
    %v803 = vadd.f32 %v696, %v766
    %v804 = vadd.f32 %v697, %v770
    %v805 = vadd.f32 %v698, %v774
    %v806 = vadd.f32 %v699, %v778
    %v807 = vadd.f32 %v700, %v782
    %v808 = vadd.f32 %v701, %v766
    %v809 = vadd.f32 %v702, %v770
    %v810 = vadd.f32 %v703, %v774
    %v811 = vadd.f32 %v704, %v778
    %v812 = vadd.f32 %v705, %v782
    %v813 = vadd.f32 %v706, %v766
    %v814 = vadd.f32 %v707, %v770
    %v815 = vadd.f32 %v708, %v774
    %v816 = vadd.f32 %v709, %v778
    %v817 = vadd.f32 %v710, %v782
    %v818 = vadd.f32 %v711, %v766
    %v819 = vadd.f32 %v712, %v770
    %v820 = vadd.f32 %v713, %v774
    %v821 = vadd.f32 %v714, %v778
    %v822 = vadd.f32 %v715, %v782
    %v823 = vadd.f32 %v716, %v766
    %v824 = vadd.f32 %v717, %v770
    %v825 = vadd.f32 %v718, %v774
    %v826 = vadd.f32 %v719, %v778
    %v827 = vadd.f32 %v720, %v782
    %v828 = vadd.f32 %v721, %v766
    %v829 = vadd.f32 %v722, %v770
    %v830 = vadd.f32 %v723, %v774
    %v831 = vadd.f32 %v724, %v778
    %v832 = vadd.f32 %v725, %v782
    %v833 = vadd.f32 %v726, %v766
    %v834 = vadd.f32 %v727, %v770
    %v835 = vadd.f32 %v728, %v774
    %v836 = vadd.f32 %v729, %v778
    %v837 = vadd.f32 %v730, %v782
    %v838 = vadd.f32 %v731, %v766
    %v839 = vadd.f32 %v732, %v770
    %v840 = vadd.f32 %v733, %v774
    %v841 = vadd.f32 %v734, %v778
    %v842 = vadd.f32 %v735, %v782
    %v843 = vadd.f32 %v736, %v766
    %v844 = vadd.f32 %v737, %v770
    %v845 = vadd.f32 %v738, %v774
    %v846 = vadd.f32 %v739, %v778
    %v847 = vadd.f32 %v740, %v782
    %v848 = vadd.f32 %v741, %v766
    %v849 = vadd.f32 %v742, %v770
    %v850 = vadd.f32 %v743, %v774
    %v851 = vadd.f32 %v744, %v778
    %v852 = vadd.f32 %v745, %v782
    %v853 = vadd.f32 %v746, %v766
    %v854 = vadd.f32 %v747, %v770
    %v855 = vadd.f32 %v748, %v774
    %v856 = vadd.f32 %v749, %v778
    %v857 = vadd.f32 %v750, %v782
    %v858 = vadd.f32 %v751, %v766
    %v859 = vadd.f32 %v752, %v770
    %v860 = vadd.f32 %v753, %v774
    %v861 = vadd.f32 %v754, %v778
    %v862 = vadd.f32 %v755, %v782
    %v863 = vadd.f32 %v756, %v766
    %v864 = vadd.f32 %v757, %v770
    %v865 = vadd.f32 %v758, %v774
    %v866 = vadd.f32 %v759, %v778
    %v867 = vadd.f32 %v760, %v782
    %v868 = vsub.f32 0.0, %v788
    %v869 = vsub.f32 0.0, %v789
    %v870 = vsub.f32 0.0, %v790
    %v871 = vsub.f32 0.0, %v791
    %v872 = vsub.f32 0.0, %v792
    %v873 = vsub.f32 0.0, %v793
    %v874 = vsub.f32 0.0, %v794
    %v875 = vsub.f32 0.0, %v795
    %v876 = vsub.f32 0.0, %v796
    %v877 = vsub.f32 0.0, %v797
    %v878 = vsub.f32 0.0, %v798
    %v879 = vsub.f32 0.0, %v799
    %v880 = vsub.f32 0.0, %v800
    %v881 = vsub.f32 0.0, %v801
    %v882 = vsub.f32 0.0, %v802
    %v883 = vsub.f32 0.0, %v803
    %v884 = vsub.f32 0.0, %v804
    %v885 = vsub.f32 0.0, %v805
    %v886 = vsub.f32 0.0, %v806
    %v887 = vsub.f32 0.0, %v807
    %v888 = vsub.f32 0.0, %v808
    %v889 = vsub.f32 0.0, %v809
    %v890 = vsub.f32 0.0, %v810
    %v891 = vsub.f32 0.0, %v811
    %v892 = vsub.f32 0.0, %v812
    %v893 = vsub.f32 0.0, %v813
    %v894 = vsub.f32 0.0, %v814
    %v895 = vsub.f32 0.0, %v815
    %v896 = vsub.f32 0.0, %v816
    %v897 = vsub.f32 0.0, %v817
    %v898 = vsub.f32 0.0, %v818
    %v899 = vsub.f32 0.0, %v819
    %v900 = vsub.f32 0.0, %v820
    %v901 = vsub.f32 0.0, %v821
    %v902 = vsub.f32 0.0, %v822
    %v903 = vsub.f32 0.0, %v823
    %v904 = vsub.f32 0.0, %v824
    %v905 = vsub.f32 0.0, %v825
    %v906 = vsub.f32 0.0, %v826
    %v907 = vsub.f32 0.0, %v827
    %v908 = vsub.f32 0.0, %v828
    %v909 = vsub.f32 0.0, %v829
    %v910 = vsub.f32 0.0, %v830
    %v911 = vsub.f32 0.0, %v831
    %v912 = vsub.f32 0.0, %v832
    %v913 = vsub.f32 0.0, %v833
    %v914 = vsub.f32 0.0, %v834
    %v915 = vsub.f32 0.0, %v835
    %v916 = vsub.f32 0.0, %v836
    %v917 = vsub.f32 0.0, %v837
    %v918 = vsub.f32 0.0, %v838
    %v919 = vsub.f32 0.0, %v839
    %v920 = vsub.f32 0.0, %v840
    %v921 = vsub.f32 0.0, %v841
    %v922 = vsub.f32 0.0, %v842
    %v923 = vsub.f32 0.0, %v843
    %v924 = vsub.f32 0.0, %v844
    %v925 = vsub.f32 0.0, %v845
    %v926 = vsub.f32 0.0, %v846
    %v927 = vsub.f32 0.0, %v847
    %v928 = vsub.f32 0.0, %v848
    %v929 = vsub.f32 0.0, %v849
    %v930 = vsub.f32 0.0, %v850
    %v931 = vsub.f32 0.0, %v851
    %v932 = vsub.f32 0.0, %v852
    %v933 = vsub.f32 0.0, %v853
    %v934 = vsub.f32 0.0, %v854
    %v935 = vsub.f32 0.0, %v855
    %v936 = vsub.f32 0.0, %v856
    %v937 = vsub.f32 0.0, %v857
    %v938 = vsub.f32 0.0, %v858
    %v939 = vsub.f32 0.0, %v859
    %v940 = vsub.f32 0.0, %v860
    %v941 = vsub.f32 0.0, %v861
    %v942 = vsub.f32 0.0, %v862
    %v943 = vsub.f32 0.0, %v863
    %v944 = vsub.f32 0.0, %v864
    %v945 = vsub.f32 0.0, %v865
    %v946 = vsub.f32 0.0, %v866
    %v947 = vsub.f32 0.0, %v867
    %v948 = vmul.f32 %v868, 1.442695
    %v949 = vpow.pop %v948
    %v950 = vmul.f32 %v869, 1.442695
    %v951 = vpow.pop %v950
    %v952 = vmul.f32 %v870, 1.442695
    %v953 = vpow.pop %v952
    %v954 = vmul.f32 %v871, 1.442695
    %v955 = vpow.pop %v954
    %v956 = vmul.f32 %v872, 1.442695
    %v957 = vpow.pop %v956
    %v958 = vmul.f32 %v873, 1.442695
    %v959 = vpow.pop %v958
    %v960 = vmul.f32 %v874, 1.442695
    %v961 = vpow.pop %v960
    %v962 = vmul.f32 %v875, 1.442695
    %v963 = vpow.pop %v962
    %v964 = vmul.f32 %v876, 1.442695
    %v965 = vpow.pop %v964
    %v966 = vmul.f32 %v877, 1.442695
    %v967 = vpow.pop %v966
    %v968 = vmul.f32 %v878, 1.442695
    %v969 = vpow.pop %v968
    %v970 = vmul.f32 %v879, 1.442695
    %v971 = vpow.pop %v970
    %v972 = vmul.f32 %v880, 1.442695
    %v973 = vpow.pop %v972
    %v974 = vmul.f32 %v881, 1.442695
    %v975 = vpow.pop %v974
    %v976 = vmul.f32 %v882, 1.442695
    %v977 = vpow.pop %v976
    %v978 = vmul.f32 %v883, 1.442695
    %v979 = vpow.pop %v978
    %v980 = vmul.f32 %v884, 1.442695
    %v981 = vpow.pop %v980
    %v982 = vmul.f32 %v885, 1.442695
    %v983 = vpow.pop %v982
    %v984 = vmul.f32 %v886, 1.442695
    %v985 = vpow.pop %v984
    %v986 = vmul.f32 %v887, 1.442695
    %v987 = vpow.pop %v986
    %v988 = vmul.f32 %v888, 1.442695
    %v989 = vpow.pop %v988
    %v990 = vmul.f32 %v889, 1.442695
    %v991 = vpow.pop %v990
    %v992 = vmul.f32 %v890, 1.442695
    %v993 = vpow.pop %v992
    %v994 = vmul.f32 %v891, 1.442695
    %v995 = vpow.pop %v994
    %v996 = vmul.f32 %v892, 1.442695
    %v997 = vpow.pop %v996
    %v998 = vmul.f32 %v893, 1.442695
    %v999 = vpow.pop %v998
    %v1000 = vmul.f32 %v894, 1.442695
    %v1001 = vpow.pop %v1000
    %v1002 = vmul.f32 %v895, 1.442695
    %v1003 = vpow.pop %v1002
    %v1004 = vmul.f32 %v896, 1.442695
    %v1005 = vpow.pop %v1004
    %v1006 = vmul.f32 %v897, 1.442695
    %v1007 = vpow.pop %v1006
    %v1008 = vmul.f32 %v898, 1.442695
    %v1009 = vpow.pop %v1008
    %v1010 = vmul.f32 %v899, 1.442695
    %v1011 = vpow.pop %v1010
    %v1012 = vmul.f32 %v900, 1.442695
    %v1013 = vpow.pop %v1012
    %v1014 = vmul.f32 %v901, 1.442695
    %v1015 = vpow.pop %v1014
    %v1016 = vmul.f32 %v902, 1.442695
    %v1017 = vpow.pop %v1016
    %v1018 = vmul.f32 %v903, 1.442695
    %v1019 = vpow.pop %v1018
    %v1020 = vmul.f32 %v904, 1.442695
    %v1021 = vpow.pop %v1020
    %v1022 = vmul.f32 %v905, 1.442695
    %v1023 = vpow.pop %v1022
    %v1024 = vmul.f32 %v906, 1.442695
    %v1025 = vpow.pop %v1024
    %v1026 = vmul.f32 %v907, 1.442695
    %v1027 = vpow.pop %v1026
    %v1028 = vmul.f32 %v908, 1.442695
    %v1029 = vpow.pop %v1028
    %v1030 = vmul.f32 %v909, 1.442695
    %v1031 = vpow.pop %v1030
    %v1032 = vmul.f32 %v910, 1.442695
    %v1033 = vpow.pop %v1032
    %v1034 = vmul.f32 %v911, 1.442695
    %v1035 = vpow.pop %v1034
    %v1036 = vmul.f32 %v912, 1.442695
    %v1037 = vpow.pop %v1036
    %v1038 = vmul.f32 %v913, 1.442695
    %v1039 = vpow.pop %v1038
    %v1040 = vmul.f32 %v914, 1.442695
    %v1041 = vpow.pop %v1040
    %v1042 = vmul.f32 %v915, 1.442695
    %v1043 = vpow.pop %v1042
    %v1044 = vmul.f32 %v916, 1.442695
    %v1045 = vpow.pop %v1044
    %v1046 = vmul.f32 %v917, 1.442695
    %v1047 = vpow.pop %v1046
    %v1048 = vmul.f32 %v918, 1.442695
    %v1049 = vpow.pop %v1048
    %v1050 = vmul.f32 %v919, 1.442695
    %v1051 = vpow.pop %v1050
    %v1052 = vmul.f32 %v920, 1.442695
    %v1053 = vpow.pop %v1052
    %v1054 = vmul.f32 %v921, 1.442695
    %v1055 = vpow.pop %v1054
    %v1056 = vmul.f32 %v922, 1.442695
    %v1057 = vpow.pop %v1056
    %v1058 = vmul.f32 %v923, 1.442695
    %v1059 = vpow.pop %v1058
    %v1060 = vmul.f32 %v924, 1.442695
    %v1061 = vpow.pop %v1060
    %v1062 = vmul.f32 %v925, 1.442695
    %v1063 = vpow.pop %v1062
    %v1064 = vmul.f32 %v926, 1.442695
    %v1065 = vpow.pop %v1064
    %v1066 = vmul.f32 %v927, 1.442695
    %v1067 = vpow.pop %v1066
    %v1068 = vmul.f32 %v928, 1.442695
    %v1069 = vpow.pop %v1068
    %v1070 = vmul.f32 %v929, 1.442695
    %v1071 = vpow.pop %v1070
    %v1072 = vmul.f32 %v930, 1.442695
    %v1073 = vpow.pop %v1072
    %v1074 = vmul.f32 %v931, 1.442695
    %v1075 = vpow.pop %v1074
    %v1076 = vmul.f32 %v932, 1.442695
    %v1077 = vpow.pop %v1076
    %v1078 = vmul.f32 %v933, 1.442695
    %v1079 = vpow.pop %v1078
    %v1080 = vmul.f32 %v934, 1.442695
    %v1081 = vpow.pop %v1080
    %v1082 = vmul.f32 %v935, 1.442695
    %v1083 = vpow.pop %v1082
    %v1084 = vmul.f32 %v936, 1.442695
    %v1085 = vpow.pop %v1084
    %v1086 = vmul.f32 %v937, 1.442695
    %v1087 = vpow.pop %v1086
    %v1088 = vmul.f32 %v938, 1.442695
    %v1089 = vpow.pop %v1088
    %v1090 = vmul.f32 %v939, 1.442695
    %v1091 = vpow.pop %v1090
    %v1092 = vmul.f32 %v940, 1.442695
    %v1093 = vpow.pop %v1092
    %v1094 = vmul.f32 %v941, 1.442695
    %v1095 = vpow.pop %v1094
    %v1096 = vmul.f32 %v942, 1.442695
    %v1097 = vpow.pop %v1096
    %v1098 = vmul.f32 %v943, 1.442695
    %v1099 = vpow.pop %v1098
    %v1100 = vmul.f32 %v944, 1.442695
    %v1101 = vpow.pop %v1100
    %v1102 = vmul.f32 %v945, 1.442695
    %v1103 = vpow.pop %v1102
    %v1104 = vmul.f32 %v946, 1.442695
    %v1105 = vpow.pop %v1104
    %v1106 = vmul.f32 %v947, 1.442695
    %v1107 = vpow.pop %v1106
    %v1108 = vadd.f32 %v949, 1.0
    %v1109 = vadd.f32 %v951, 1.0
    %v1110 = vadd.f32 %v953, 1.0
    %v1111 = vadd.f32 %v955, 1.0
    %v1112 = vadd.f32 %v957, 1.0
    %v1113 = vadd.f32 %v959, 1.0
    %v1114 = vadd.f32 %v961, 1.0
    %v1115 = vadd.f32 %v963, 1.0
    %v1116 = vadd.f32 %v965, 1.0
    %v1117 = vadd.f32 %v967, 1.0
    %v1118 = vadd.f32 %v969, 1.0
    %v1119 = vadd.f32 %v971, 1.0
    %v1120 = vadd.f32 %v973, 1.0
    %v1121 = vadd.f32 %v975, 1.0
    %v1122 = vadd.f32 %v977, 1.0
    %v1123 = vadd.f32 %v979, 1.0
    %v1124 = vadd.f32 %v981, 1.0
    %v1125 = vadd.f32 %v983, 1.0
    %v1126 = vadd.f32 %v985, 1.0
    %v1127 = vadd.f32 %v987, 1.0
    %v1128 = vadd.f32 %v989, 1.0
    %v1129 = vadd.f32 %v991, 1.0
    %v1130 = vadd.f32 %v993, 1.0
    %v1131 = vadd.f32 %v995, 1.0
    %v1132 = vadd.f32 %v997, 1.0
    %v1133 = vadd.f32 %v999, 1.0
    %v1134 = vadd.f32 %v1001, 1.0
    %v1135 = vadd.f32 %v1003, 1.0
    %v1136 = vadd.f32 %v1005, 1.0
    %v1137 = vadd.f32 %v1007, 1.0
    %v1138 = vadd.f32 %v1009, 1.0
    %v1139 = vadd.f32 %v1011, 1.0
    %v1140 = vadd.f32 %v1013, 1.0
    %v1141 = vadd.f32 %v1015, 1.0
    %v1142 = vadd.f32 %v1017, 1.0
    %v1143 = vadd.f32 %v1019, 1.0
    %v1144 = vadd.f32 %v1021, 1.0
    %v1145 = vadd.f32 %v1023, 1.0
    %v1146 = vadd.f32 %v1025, 1.0
    %v1147 = vadd.f32 %v1027, 1.0
    %v1148 = vadd.f32 %v1029, 1.0
    %v1149 = vadd.f32 %v1031, 1.0
    %v1150 = vadd.f32 %v1033, 1.0
    %v1151 = vadd.f32 %v1035, 1.0
    %v1152 = vadd.f32 %v1037, 1.0
    %v1153 = vadd.f32 %v1039, 1.0
    %v1154 = vadd.f32 %v1041, 1.0
    %v1155 = vadd.f32 %v1043, 1.0
    %v1156 = vadd.f32 %v1045, 1.0
    %v1157 = vadd.f32 %v1047, 1.0
    %v1158 = vadd.f32 %v1049, 1.0
    %v1159 = vadd.f32 %v1051, 1.0
    %v1160 = vadd.f32 %v1053, 1.0
    %v1161 = vadd.f32 %v1055, 1.0
    %v1162 = vadd.f32 %v1057, 1.0
    %v1163 = vadd.f32 %v1059, 1.0
    %v1164 = vadd.f32 %v1061, 1.0
    %v1165 = vadd.f32 %v1063, 1.0
    %v1166 = vadd.f32 %v1065, 1.0
    %v1167 = vadd.f32 %v1067, 1.0
    %v1168 = vadd.f32 %v1069, 1.0
    %v1169 = vadd.f32 %v1071, 1.0
    %v1170 = vadd.f32 %v1073, 1.0
    %v1171 = vadd.f32 %v1075, 1.0
    %v1172 = vadd.f32 %v1077, 1.0
    %v1173 = vadd.f32 %v1079, 1.0
    %v1174 = vadd.f32 %v1081, 1.0
    %v1175 = vadd.f32 %v1083, 1.0
    %v1176 = vadd.f32 %v1085, 1.0
    %v1177 = vadd.f32 %v1087, 1.0
    %v1178 = vadd.f32 %v1089, 1.0
    %v1179 = vadd.f32 %v1091, 1.0
    %v1180 = vadd.f32 %v1093, 1.0
    %v1181 = vadd.f32 %v1095, 1.0
    %v1182 = vadd.f32 %v1097, 1.0
    %v1183 = vadd.f32 %v1099, 1.0
    %v1184 = vadd.f32 %v1101, 1.0
    %v1185 = vadd.f32 %v1103, 1.0
    %v1186 = vadd.f32 %v1105, 1.0
    %v1187 = vadd.f32 %v1107, 1.0
    %v1188 = vrcp.pop %v1108
    %v1189 = vrcp.pop %v1109
    %v1190 = vrcp.pop %v1110
    %v1191 = vrcp.pop %v1111
    %v1192 = vrcp.pop %v1112
    %v1193 = vrcp.pop %v1113
    %v1194 = vrcp.pop %v1114
    %v1195 = vrcp.pop %v1115
    %v1196 = vrcp.pop %v1116
    %v1197 = vrcp.pop %v1117
    %v1198 = vrcp.pop %v1118
    %v1199 = vrcp.pop %v1119
    %v1200 = vrcp.pop %v1120
    %v1201 = vrcp.pop %v1121
    %v1202 = vrcp.pop %v1122
    %v1203 = vrcp.pop %v1123
    %v1204 = vrcp.pop %v1124
    %v1205 = vrcp.pop %v1125
    %v1206 = vrcp.pop %v1126
    %v1207 = vrcp.pop %v1127
    %v1208 = vrcp.pop %v1128
    %v1209 = vrcp.pop %v1129
    %v1210 = vrcp.pop %v1130
    %v1211 = vrcp.pop %v1131
    %v1212 = vrcp.pop %v1132
    %v1213 = vrcp.pop %v1133
    %v1214 = vrcp.pop %v1134
    %v1215 = vrcp.pop %v1135
    %v1216 = vrcp.pop %v1136
    %v1217 = vrcp.pop %v1137
    %v1218 = vrcp.pop %v1138
    %v1219 = vrcp.pop %v1139
    %v1220 = vrcp.pop %v1140
    %v1221 = vrcp.pop %v1141
    %v1222 = vrcp.pop %v1142
    %v1223 = vrcp.pop %v1143
    %v1224 = vrcp.pop %v1144
    %v1225 = vrcp.pop %v1145
    %v1226 = vrcp.pop %v1146
    %v1227 = vrcp.pop %v1147
    %v1228 = vrcp.pop %v1148
    %v1229 = vrcp.pop %v1149
    %v1230 = vrcp.pop %v1150
    %v1231 = vrcp.pop %v1151
    %v1232 = vrcp.pop %v1152
    %v1233 = vrcp.pop %v1153
    %v1234 = vrcp.pop %v1154
    %v1235 = vrcp.pop %v1155
    %v1236 = vrcp.pop %v1156
    %v1237 = vrcp.pop %v1157
    %v1238 = vrcp.pop %v1158
    %v1239 = vrcp.pop %v1159
    %v1240 = vrcp.pop %v1160
    %v1241 = vrcp.pop %v1161
    %v1242 = vrcp.pop %v1162
    %v1243 = vrcp.pop %v1163
    %v1244 = vrcp.pop %v1164
    %v1245 = vrcp.pop %v1165
    %v1246 = vrcp.pop %v1166
    %v1247 = vrcp.pop %v1167
    %v1248 = vrcp.pop %v1168
    %v1249 = vrcp.pop %v1169
    %v1250 = vrcp.pop %v1170
    %v1251 = vrcp.pop %v1171
    %v1252 = vrcp.pop %v1172
    %v1253 = vrcp.pop %v1173
    %v1254 = vrcp.pop %v1174
    %v1255 = vrcp.pop %v1175
    %v1256 = vrcp.pop %v1176
    %v1257 = vrcp.pop %v1177
    %v1258 = vrcp.pop %v1178
    %v1259 = vrcp.pop %v1179
    %v1260 = vrcp.pop %v1180
    %v1261 = vrcp.pop %v1181
    %v1262 = vrcp.pop %v1182
    %v1263 = vrcp.pop %v1183
    %v1264 = vrcp.pop %v1184
    %v1265 = vrcp.pop %v1185
    %v1266 = vrcp.pop %v1186
    %v1267 = vrcp.pop %v1187
    %v1268 = vpack.c.bf16 %v1193, %v1188
    %v1269 = vpack.c.bf16 %v1194, %v1189
    %v1270 = vpack.c.bf16 %v1195, %v1190
    %v1271 = vpack.c.bf16 %v1196, %v1191
    %v1272 = vpack.c.bf16 %v1197, %v1192
    %v1273 = vpack.c.bf16 %v1203, %v1198
    %v1274 = vpack.c.bf16 %v1204, %v1199
    %v1275 = vpack.c.bf16 %v1205, %v1200
    %v1276 = vpack.c.bf16 %v1206, %v1201
    %v1277 = vpack.c.bf16 %v1207, %v1202
    %v1278 = vpack.c.bf16 %v1213, %v1208
    %v1279 = vpack.c.bf16 %v1214, %v1209
    %v1280 = vpack.c.bf16 %v1215, %v1210
    %v1281 = vpack.c.bf16 %v1216, %v1211
    %v1282 = vpack.c.bf16 %v1217, %v1212
    %v1283 = vpack.c.bf16 %v1223, %v1218
    %v1284 = vpack.c.bf16 %v1224, %v1219
    %v1285 = vpack.c.bf16 %v1225, %v1220
    %v1286 = vpack.c.bf16 %v1226, %v1221
    %v1287 = vpack.c.bf16 %v1227, %v1222
    %v1288 = vpack.c.bf16 %v1233, %v1228
    %v1289 = vpack.c.bf16 %v1234, %v1229
    %v1290 = vpack.c.bf16 %v1235, %v1230
    %v1291 = vpack.c.bf16 %v1236, %v1231
    %v1292 = vpack.c.bf16 %v1237, %v1232
    %v1293 = vpack.c.bf16 %v1243, %v1238
    %v1294 = vpack.c.bf16 %v1244, %v1239
    %v1295 = vpack.c.bf16 %v1245, %v1240
    %v1296 = vpack.c.bf16 %v1246, %v1241
    %v1297 = vpack.c.bf16 %v1247, %v1242
    %v1298 = vpack.c.bf16 %v1253, %v1248
    %v1299 = vpack.c.bf16 %v1254, %v1249
    %v1300 = vpack.c.bf16 %v1255, %v1250
    %v1301 = vpack.c.bf16 %v1256, %v1251
    %v1302 = vpack.c.bf16 %v1257, %v1252
    %v1303 = vpack.c.bf16 %v1263, %v1258
    %v1304 = vpack.c.bf16 %v1264, %v1259
    %v1305 = vpack.c.bf16 %v1265, %v1260
    %v1306 = vpack.c.bf16 %v1266, %v1261
    %v1307 = vpack.c.bf16 %v1267, %v1262
    %v1308 = vld [vmem:[#allocation5] sm:$0xff]
    %v1309 = vld [vmem:[#allocation5 + $0x8] sm:$0xff]
    %v1310 = vld [vmem:[#allocation5 + $0x10] sm:$0xff]
    %v1311 = vld [vmem:[#allocation5 + $0x18] sm:$0xff]
    %v1312 = vld [vmem:[#allocation5 + $0x20] sm:$0xff]
    %v1313 = vld [vmem:[#allocation5 + $0x28] sm:$0xff]
    %v1314 = vld [vmem:[#allocation5 + $0x30] sm:$0xff]
    %v1315 = vld [vmem:[#allocation5 + $0x38] sm:$0xff]
    %v1316 = vld [vmem:[#allocation5 + $0x40] sm:$0xff]
    %v1317 = vld [vmem:[#allocation5 + $0x48] sm:$0xff]
    %v1318 = vld [vmem:[#allocation5 + $0x50] sm:$0xff]
    %v1319 = vld [vmem:[#allocation5 + $0x58] sm:$0xff]
    %v1320 = vld [vmem:[#allocation5 + $0x60] sm:$0xff]
    %v1321 = vld [vmem:[#allocation5 + $0x68] sm:$0xff]
    %v1322 = vld [vmem:[#allocation5 + $0x70] sm:$0xff]
    %v1323 = vld [vmem:[#allocation5 + $0x78] sm:$0xff]
    %v1324 = vld [vmem:[#allocation5 + $0x80] sm:$0xff]
    %v1325 = vld [vmem:[#allocation5 + $0x88] sm:$0xff]
    %v1326 = vld [vmem:[#allocation5 + $0x90] sm:$0xff]
    %v1327 = vld [vmem:[#allocation5 + $0x98] sm:$0xff]
    %v1328 = vld [vmem:[#allocation5 + $0xa0] sm:$0xff]
    %v1329 = vld [vmem:[#allocation5 + $0xa8] sm:$0xff]
    %v1330 = vld [vmem:[#allocation5 + $0xb0] sm:$0xff]
    %v1331 = vld [vmem:[#allocation5 + $0xb8] sm:$0xff]
    %v1332 = vld [vmem:[#allocation5 + $0xc0] sm:$0xff]
    %v1333 = vld [vmem:[#allocation5 + $0xc8] sm:$0xff]
    %v1334 = vld [vmem:[#allocation5 + $0xd0] sm:$0xff]
    %v1335 = vld [vmem:[#allocation5 + $0xd8] sm:$0xff]
    %v1336 = vld [vmem:[#allocation5 + $0xe0] sm:$0xff]
    %v1337 = vld [vmem:[#allocation5 + $0xe8] sm:$0xff]
    %v1338 = vld [vmem:[#allocation5 + $0xf0] sm:$0xff]
    %v1339 = vld [vmem:[#allocation5 + $0xf8] sm:$0xff]
    %v1340 = vld [vmem:[#allocation5 + $0x100] sm:$0xff]
    %v1341 = vld [vmem:[#allocation5 + $0x108] sm:$0xff]
    %v1342 = vld [vmem:[#allocation5 + $0x110] sm:$0xff]
    %v1343 = vld [vmem:[#allocation5 + $0x118] sm:$0xff]
    %v1344 = vld [vmem:[#allocation5 + $0x120] sm:$0xff]
    %v1345 = vld [vmem:[#allocation5 + $0x128] sm:$0xff]
    %v1346 = vld [vmem:[#allocation5 + $0x130] sm:$0xff]
    %v1347 = vld [vmem:[#allocation5 + $0x138] sm:$0xff]
    %v1348 = vld [vmem:[#allocation5 + $0x140] sm:$0xff]
    %v1349 = vld [vmem:[#allocation5 + $0x148] sm:$0xff]
    %v1350 = vld [vmem:[#allocation5 + $0x150] sm:$0xff]
    %v1351 = vld [vmem:[#allocation5 + $0x158] sm:$0xff]
    %v1352 = vld [vmem:[#allocation5 + $0x160] sm:$0xff]
    %v1353 = vld [vmem:[#allocation5 + $0x168] sm:$0xff]
    %v1354 = vld [vmem:[#allocation5 + $0x170] sm:$0xff]
    %v1355 = vld [vmem:[#allocation5 + $0x178] sm:$0xff]
    %v1356 = vld [vmem:[#allocation5 + $0x180] sm:$0xff]
    %v1357 = vld [vmem:[#allocation5 + $0x188] sm:$0xff]
    %v1358 = vld [vmem:[#allocation5 + $0x190] sm:$0xff]
    %v1359 = vld [vmem:[#allocation5 + $0x198] sm:$0xff]
    %v1360 = vld [vmem:[#allocation5 + $0x1a0] sm:$0xff]
    %v1361 = vld [vmem:[#allocation5 + $0x1a8] sm:$0xff]
    %v1362 = vld [vmem:[#allocation5 + $0x1b0] sm:$0xff]
    %v1363 = vld [vmem:[#allocation5 + $0x1b8] sm:$0xff]
    %v1364 = vld [vmem:[#allocation5 + $0x1c0] sm:$0xff]
    %v1365 = vld [vmem:[#allocation5 + $0x1c8] sm:$0xff]
    %v1366 = vld [vmem:[#allocation5 + $0x1d0] sm:$0xff]
    %v1367 = vld [vmem:[#allocation5 + $0x1d8] sm:$0xff]
    %v1368 = vld [vmem:[#allocation5 + $0x1e0] sm:$0xff]
    %v1369 = vld [vmem:[#allocation5 + $0x1e8] sm:$0xff]
    %v1370 = vld [vmem:[#allocation5 + $0x1f0] sm:$0xff]
    %v1371 = vld [vmem:[#allocation5 + $0x1f8] sm:$0xff]
    %v1372 = vld [vmem:[#allocation5 + $0x200] sm:$0xff]
    %v1373 = vld [vmem:[#allocation5 + $0x208] sm:$0xff]
    %v1374 = vld [vmem:[#allocation5 + $0x210] sm:$0xff]
    %v1375 = vld [vmem:[#allocation5 + $0x218] sm:$0xff]
    %v1376 = vld [vmem:[#allocation5 + $0x220] sm:$0xff]
    %v1377 = vld [vmem:[#allocation5 + $0x228] sm:$0xff]
    %v1378 = vld [vmem:[#allocation5 + $0x230] sm:$0xff]
    %v1379 = vld [vmem:[#allocation5 + $0x238] sm:$0xff]
    %v1380 = vld [vmem:[#allocation5 + $0x240] sm:$0xff]
    %v1381 = vld [vmem:[#allocation5 + $0x248] sm:$0xff]
    %v1382 = vld [vmem:[#allocation5 + $0x250] sm:$0xff]
    %v1383 = vld [vmem:[#allocation5 + $0x258] sm:$0xff]
    %v1384 = vld [vmem:[#allocation5 + $0x260] sm:$0xff]
    %v1385 = vld [vmem:[#allocation5 + $0x268] sm:$0xff]
    %v1386 = vld [vmem:[#allocation5 + $0x270] sm:$0xff]
    %v1387 = vld [vmem:[#allocation5 + $0x278] sm:$0xff]
    %v1388 = vld [vmem:[%s4] sm:$0x3]
    %v1390 = vlaneseq
    %v1391 = vshrl.u32 %v1390, 7
    %v1392 = vsub.s32 0, %v1391
    %v1393 = vrot.slane %v1388, %v1392
    %v1394 = vlaneseq
    %v1395 = vshrl.u32 %v1394, 7
    %v1396 = vsub.s32 1, %v1395
    %v1397 = vrot.slane %v1388, %v1396
    %v1480 = vunpack.c.l.b16 %v1308
    %v1481 = vunpack.c.h.b16 %v1308
    %v1482 = vunpack.c.l.b16 %v1309
    %v1483 = vunpack.c.h.b16 %v1309
    %v1484 = vunpack.c.l.b16 %v1310
    %v1485 = vunpack.c.h.b16 %v1310
    %v1486 = vunpack.c.l.b16 %v1311
    %v1487 = vunpack.c.h.b16 %v1311
    %v1488 = vunpack.c.l.b16 %v1312
    %v1489 = vunpack.c.h.b16 %v1312
    %v1490 = vunpack.c.l.b16 %v1313
    %v1491 = vunpack.c.h.b16 %v1313
    %v1492 = vunpack.c.l.b16 %v1314
    %v1493 = vunpack.c.h.b16 %v1314
    %v1494 = vunpack.c.l.b16 %v1315
    %v1495 = vunpack.c.h.b16 %v1315
    %v1496 = vunpack.c.l.b16 %v1316
    %v1497 = vunpack.c.h.b16 %v1316
    %v1498 = vunpack.c.l.b16 %v1317
    %v1499 = vunpack.c.h.b16 %v1317
    %v1500 = vunpack.c.l.b16 %v1318
    %v1501 = vunpack.c.h.b16 %v1318
    %v1502 = vunpack.c.l.b16 %v1319
    %v1503 = vunpack.c.h.b16 %v1319
    %v1504 = vunpack.c.l.b16 %v1320
    %v1505 = vunpack.c.h.b16 %v1320
    %v1506 = vunpack.c.l.b16 %v1321
    %v1507 = vunpack.c.h.b16 %v1321
    %v1508 = vunpack.c.l.b16 %v1322
    %v1509 = vunpack.c.h.b16 %v1322
    %v1510 = vunpack.c.l.b16 %v1323
    %v1511 = vunpack.c.h.b16 %v1323
    %v1512 = vunpack.c.l.b16 %v1324
    %v1513 = vunpack.c.h.b16 %v1324
    %v1514 = vunpack.c.l.b16 %v1325
    %v1515 = vunpack.c.h.b16 %v1325
    %v1516 = vunpack.c.l.b16 %v1326
    %v1517 = vunpack.c.h.b16 %v1326
    %v1518 = vunpack.c.l.b16 %v1327
    %v1519 = vunpack.c.h.b16 %v1327
    %v1520 = vunpack.c.l.b16 %v1328
    %v1521 = vunpack.c.h.b16 %v1328
    %v1522 = vunpack.c.l.b16 %v1329
    %v1523 = vunpack.c.h.b16 %v1329
    %v1524 = vunpack.c.l.b16 %v1330
    %v1525 = vunpack.c.h.b16 %v1330
    %v1526 = vunpack.c.l.b16 %v1331
    %v1527 = vunpack.c.h.b16 %v1331
    %v1528 = vunpack.c.l.b16 %v1332
    %v1529 = vunpack.c.h.b16 %v1332
    %v1530 = vunpack.c.l.b16 %v1333
    %v1531 = vunpack.c.h.b16 %v1333
    %v1532 = vunpack.c.l.b16 %v1334
    %v1533 = vunpack.c.h.b16 %v1334
    %v1534 = vunpack.c.l.b16 %v1335
    %v1535 = vunpack.c.h.b16 %v1335
    %v1536 = vunpack.c.l.b16 %v1336
    %v1537 = vunpack.c.h.b16 %v1336
    %v1538 = vunpack.c.l.b16 %v1337
    %v1539 = vunpack.c.h.b16 %v1337
    %v1540 = vunpack.c.l.b16 %v1338
    %v1541 = vunpack.c.h.b16 %v1338
    %v1542 = vunpack.c.l.b16 %v1339
    %v1543 = vunpack.c.h.b16 %v1339
    %v1544 = vunpack.c.l.b16 %v1340
    %v1545 = vunpack.c.h.b16 %v1340
    %v1546 = vunpack.c.l.b16 %v1341
    %v1547 = vunpack.c.h.b16 %v1341
    %v1548 = vunpack.c.l.b16 %v1342
    %v1549 = vunpack.c.h.b16 %v1342
    %v1550 = vunpack.c.l.b16 %v1343
    %v1551 = vunpack.c.h.b16 %v1343
    %v1552 = vunpack.c.l.b16 %v1344
    %v1553 = vunpack.c.h.b16 %v1344
    %v1554 = vunpack.c.l.b16 %v1345
    %v1555 = vunpack.c.h.b16 %v1345
    %v1556 = vunpack.c.l.b16 %v1346
    %v1557 = vunpack.c.h.b16 %v1346
    %v1558 = vunpack.c.l.b16 %v1347
    %v1559 = vunpack.c.h.b16 %v1347
    %v1560 = vunpack.c.l.b16 %v1348
    %v1561 = vunpack.c.h.b16 %v1348
    %v1562 = vunpack.c.l.b16 %v1349
    %v1563 = vunpack.c.h.b16 %v1349
    %v1564 = vunpack.c.l.b16 %v1350
    %v1565 = vunpack.c.h.b16 %v1350
    %v1566 = vunpack.c.l.b16 %v1351
    %v1567 = vunpack.c.h.b16 %v1351
    %v1568 = vunpack.c.l.b16 %v1352
    %v1569 = vunpack.c.h.b16 %v1352
    %v1570 = vunpack.c.l.b16 %v1353
    %v1571 = vunpack.c.h.b16 %v1353
    %v1572 = vunpack.c.l.b16 %v1354
    %v1573 = vunpack.c.h.b16 %v1354
    %v1574 = vunpack.c.l.b16 %v1355
    %v1575 = vunpack.c.h.b16 %v1355
    %v1576 = vunpack.c.l.b16 %v1356
    %v1577 = vunpack.c.h.b16 %v1356
    %v1578 = vunpack.c.l.b16 %v1357
    %v1579 = vunpack.c.h.b16 %v1357
    %v1580 = vunpack.c.l.b16 %v1358
    %v1581 = vunpack.c.h.b16 %v1358
    %v1582 = vunpack.c.l.b16 %v1359
    %v1583 = vunpack.c.h.b16 %v1359
    %v1584 = vunpack.c.l.b16 %v1360
    %v1585 = vunpack.c.h.b16 %v1360
    %v1586 = vunpack.c.l.b16 %v1361
    %v1587 = vunpack.c.h.b16 %v1361
    %v1588 = vunpack.c.l.b16 %v1362
    %v1589 = vunpack.c.h.b16 %v1362
    %v1590 = vunpack.c.l.b16 %v1363
    %v1591 = vunpack.c.h.b16 %v1363
    %v1592 = vunpack.c.l.b16 %v1364
    %v1593 = vunpack.c.h.b16 %v1364
    %v1594 = vunpack.c.l.b16 %v1365
    %v1595 = vunpack.c.h.b16 %v1365
    %v1596 = vunpack.c.l.b16 %v1366
    %v1597 = vunpack.c.h.b16 %v1366
    %v1598 = vunpack.c.l.b16 %v1367
    %v1599 = vunpack.c.h.b16 %v1367
    %v1600 = vunpack.c.l.b16 %v1368
    %v1601 = vunpack.c.h.b16 %v1368
    %v1602 = vunpack.c.l.b16 %v1369
    %v1603 = vunpack.c.h.b16 %v1369
    %v1604 = vunpack.c.l.b16 %v1370
    %v1605 = vunpack.c.h.b16 %v1370
    %v1606 = vunpack.c.l.b16 %v1371
    %v1607 = vunpack.c.h.b16 %v1371
    %v1608 = vunpack.c.l.b16 %v1372
    %v1609 = vunpack.c.h.b16 %v1372
    %v1610 = vunpack.c.l.b16 %v1373
    %v1611 = vunpack.c.h.b16 %v1373
    %v1612 = vunpack.c.l.b16 %v1374
    %v1613 = vunpack.c.h.b16 %v1374
    %v1614 = vunpack.c.l.b16 %v1375
    %v1615 = vunpack.c.h.b16 %v1375
    %v1616 = vunpack.c.l.b16 %v1376
    %v1617 = vunpack.c.h.b16 %v1376
    %v1618 = vunpack.c.l.b16 %v1377
    %v1619 = vunpack.c.h.b16 %v1377
    %v1620 = vunpack.c.l.b16 %v1378
    %v1621 = vunpack.c.h.b16 %v1378
    %v1622 = vunpack.c.l.b16 %v1379
    %v1623 = vunpack.c.h.b16 %v1379
    %v1624 = vunpack.c.l.b16 %v1380
    %v1625 = vunpack.c.h.b16 %v1380
    %v1626 = vunpack.c.l.b16 %v1381
    %v1627 = vunpack.c.h.b16 %v1381
    %v1628 = vunpack.c.l.b16 %v1382
    %v1629 = vunpack.c.h.b16 %v1382
    %v1630 = vunpack.c.l.b16 %v1383
    %v1631 = vunpack.c.h.b16 %v1383
    %v1632 = vunpack.c.l.b16 %v1384
    %v1633 = vunpack.c.h.b16 %v1384
    %v1634 = vunpack.c.l.b16 %v1385
    %v1635 = vunpack.c.h.b16 %v1385
    %v1636 = vunpack.c.l.b16 %v1386
    %v1637 = vunpack.c.h.b16 %v1386
    %v1638 = vunpack.c.l.b16 %v1387
    %v1639 = vunpack.c.h.b16 %v1387
    %v1640 = vpack.c.b16 %v1482, %v1480
    %v1641 = vpack.c.b16 %v1483, %v1481
    %v1642 = vpack.c.b16 %v1486, %v1484
    %v1643 = vpack.c.b16 %v1487, %v1485
    %v1644 = vpack.c.b16 %v1490, %v1488
    %v1645 = vpack.c.b16 %v1491, %v1489
    %v1646 = vpack.c.b16 %v1494, %v1492
    %v1647 = vpack.c.b16 %v1495, %v1493
    %v1648 = vpack.c.b16 %v1498, %v1496
    %v1649 = vpack.c.b16 %v1499, %v1497
    %v1650 = vpack.c.b16 %v1502, %v1500
    %v1651 = vpack.c.b16 %v1503, %v1501
    %v1652 = vpack.c.b16 %v1506, %v1504
    %v1653 = vpack.c.b16 %v1507, %v1505
    %v1654 = vpack.c.b16 %v1510, %v1508
    %v1655 = vpack.c.b16 %v1511, %v1509
    %v1656 = vpack.c.b16 %v1514, %v1512
    %v1657 = vpack.c.b16 %v1515, %v1513
    %v1658 = vpack.c.b16 %v1518, %v1516
    %v1659 = vpack.c.b16 %v1519, %v1517
    %v1660 = vpack.c.b16 %v1522, %v1520
    %v1661 = vpack.c.b16 %v1523, %v1521
    %v1662 = vpack.c.b16 %v1526, %v1524
    %v1663 = vpack.c.b16 %v1527, %v1525
    %v1664 = vpack.c.b16 %v1530, %v1528
    %v1665 = vpack.c.b16 %v1531, %v1529
    %v1666 = vpack.c.b16 %v1534, %v1532
    %v1667 = vpack.c.b16 %v1535, %v1533
    %v1668 = vpack.c.b16 %v1538, %v1536
    %v1669 = vpack.c.b16 %v1539, %v1537
    %v1670 = vpack.c.b16 %v1542, %v1540
    %v1671 = vpack.c.b16 %v1543, %v1541
    %v1672 = vpack.c.b16 %v1546, %v1544
    %v1673 = vpack.c.b16 %v1547, %v1545
    %v1674 = vpack.c.b16 %v1550, %v1548
    %v1675 = vpack.c.b16 %v1551, %v1549
    %v1676 = vpack.c.b16 %v1554, %v1552
    %v1677 = vpack.c.b16 %v1555, %v1553
    %v1678 = vpack.c.b16 %v1558, %v1556
    %v1679 = vpack.c.b16 %v1559, %v1557
    %v1680 = vpack.c.b16 %v1562, %v1560
    %v1681 = vpack.c.b16 %v1563, %v1561
    %v1682 = vpack.c.b16 %v1566, %v1564
    %v1683 = vpack.c.b16 %v1567, %v1565
    %v1684 = vpack.c.b16 %v1570, %v1568
    %v1685 = vpack.c.b16 %v1571, %v1569
    %v1686 = vpack.c.b16 %v1574, %v1572
    %v1687 = vpack.c.b16 %v1575, %v1573
    %v1688 = vpack.c.b16 %v1578, %v1576
    %v1689 = vpack.c.b16 %v1579, %v1577
    %v1690 = vpack.c.b16 %v1582, %v1580
    %v1691 = vpack.c.b16 %v1583, %v1581
    %v1692 = vpack.c.b16 %v1586, %v1584
    %v1693 = vpack.c.b16 %v1587, %v1585
    %v1694 = vpack.c.b16 %v1590, %v1588
    %v1695 = vpack.c.b16 %v1591, %v1589
    %v1696 = vpack.c.b16 %v1594, %v1592
    %v1697 = vpack.c.b16 %v1595, %v1593
    %v1698 = vpack.c.b16 %v1598, %v1596
    %v1699 = vpack.c.b16 %v1599, %v1597
    %v1700 = vpack.c.b16 %v1602, %v1600
    %v1701 = vpack.c.b16 %v1603, %v1601
    %v1702 = vpack.c.b16 %v1606, %v1604
    %v1703 = vpack.c.b16 %v1607, %v1605
    %v1704 = vpack.c.b16 %v1610, %v1608
    %v1705 = vpack.c.b16 %v1611, %v1609
    %v1706 = vpack.c.b16 %v1614, %v1612
    %v1707 = vpack.c.b16 %v1615, %v1613
    %v1708 = vpack.c.b16 %v1618, %v1616
    %v1709 = vpack.c.b16 %v1619, %v1617
    %v1710 = vpack.c.b16 %v1622, %v1620
    %v1711 = vpack.c.b16 %v1623, %v1621
    %v1712 = vpack.c.b16 %v1626, %v1624
    %v1713 = vpack.c.b16 %v1627, %v1625
    %v1714 = vpack.c.b16 %v1630, %v1628
    %v1715 = vpack.c.b16 %v1631, %v1629
    %v1716 = vpack.c.b16 %v1634, %v1632
    %v1717 = vpack.c.b16 %v1635, %v1633
    %v1718 = vpack.c.b16 %v1638, %v1636
    %v1719 = vpack.c.b16 %v1639, %v1637
    %1800 = vmatprep.subr.bf16.mxu0 %v1641
    %1801 = vmatpush1.bf16.msra.mxu0 %v1640
    %1802 = vmatprep.subr.bf16.mxu0 %v1643
    %1803 = vmatpush1.bf16.msra.mxu0 %v1642
    %1804 = vmatprep.subr.bf16.mxu0 %v1645
    %1805 = vmatpush1.bf16.msra.mxu0 %v1644
    %1806 = vmatprep.subr.bf16.mxu0 %v1647
    %1807 = vmatpush1.bf16.msra.mxu0 %v1646
    %1808 = vmatprep.subr.bf16.mxu0 %v1649
    %1809 = vmatpush1.bf16.msra.mxu0 %v1648
    %1810 = vmatprep.subr.bf16.mxu0 %v1651
    %1811 = vmatpush1.bf16.msra.mxu0 %v1650
    %1812 = vmatprep.subr.bf16.mxu0 %v1653
    %1813 = vmatpush1.bf16.msra.mxu0 %v1652
    %1814 = vmatprep.subr.bf16.mxu0 %v1655
    %1815 = vmatpush1.bf16.msra.mxu0 %v1654
    %1816 = vmatprep.subr.bf16.mxu0 %v1657
    %1817 = vmatpush1.bf16.msra.mxu0 %v1656
    %1818 = vmatprep.subr.bf16.mxu0 %v1659
    %1819 = vmatpush1.bf16.msra.mxu0 %v1658
    %1820 = vmatprep.subr.bf16.mxu0 %v1661
    %1821 = vmatpush1.bf16.msra.mxu0 %v1660
    %1822 = vmatprep.subr.bf16.mxu0 %v1663
    %1823 = vmatpush1.bf16.msra.mxu0 %v1662
    %1824 = vmatprep.subr.bf16.mxu0 %v1665
    %1825 = vmatpush1.bf16.msra.mxu0 %v1664
    %1826 = vmatprep.subr.bf16.mxu0 %v1667
    %1827 = vmatpush1.bf16.msra.mxu0 %v1666
    %1828 = vmatprep.subr.bf16.mxu0 %v1669
    %1829 = vmatpush1.bf16.msra.mxu0 %v1668
    %1830 = vmatprep.subr.bf16.mxu0 %v1671
    %1831 = vmatpush1.bf16.msra.mxu0 %v1670
    %1832 = vmatprep.mubr.bf16.mxu0 %v1269
    %1833 = vmatmul.mubr.bf16.gmra.mrb[0].mxu0 %v1268
    %v1834 = vpop.f32.mrb[0].mxu0
    %v1835 = vadd.f32 %v1393, %v1834
    %v1836 = vpop.f32.mrb[0].mxu0
    %v1837 = vadd.f32 %v1397, %v1836
    %v1838 = vpop.f32.mrb[0].mxu0
    %v1839 = vadd.f32 %v1393, %v1838
    %v1840 = vpop.f32.mrb[0].mxu0
    %v1841 = vadd.f32 %v1397, %v1840
    %1842 = vmatprep.mubr.bf16.mxu0 %v1274
    %1843 = vmatmul.mubr.bf16.gmra.mrb[0].mxu0 %v1273
    %v1844 = vpop.f32.mrb[0].mxu0
    %v1845 = vadd.f32 %v1393, %v1844
    %v1846 = vpop.f32.mrb[0].mxu0
    %v1847 = vadd.f32 %v1397, %v1846
    %v1848 = vpop.f32.mrb[0].mxu0
    %v1849 = vadd.f32 %v1393, %v1848
    %v1850 = vpop.f32.mrb[0].mxu0
    %v1851 = vadd.f32 %v1397, %v1850
    %1852 = vmatprep.mubr.bf16.mxu0 %v1279
    %1853 = vmatmul.mubr.bf16.gmra.mrb[0].mxu0 %v1278
    %v1854 = vpop.f32.mrb[0].mxu0
    %v1855 = vadd.f32 %v1393, %v1854
    %v1856 = vpop.f32.mrb[0].mxu0
    %v1857 = vadd.f32 %v1397, %v1856
    %v1858 = vpop.f32.mrb[0].mxu0
    %v1859 = vadd.f32 %v1393, %v1858
    %v1860 = vpop.f32.mrb[0].mxu0
    %v1861 = vadd.f32 %v1397, %v1860
    %1862 = vmatprep.mubr.bf16.mxu0 %v1284
    %1863 = vmatmul.mubr.bf16.gmra.mrb[0].mxu0 %v1283
    %v1864 = vpop.f32.mrb[0].mxu0
    %v1865 = vadd.f32 %v1393, %v1864
    %v1866 = vpop.f32.mrb[0].mxu0
    %v1867 = vadd.f32 %v1397, %v1866
    %v1868 = vpop.f32.mrb[0].mxu0
    %v1869 = vadd.f32 %v1393, %v1868
    %v1870 = vpop.f32.mrb[0].mxu0
    %v1871 = vadd.f32 %v1397, %v1870
    %1872 = vmatprep.mubr.bf16.mxu0 %v1289
    %1873 = vmatmul.mubr.bf16.gmra.mrb[0].mxu0 %v1288
    %v1874 = vpop.f32.mrb[0].mxu0
    %v1875 = vadd.f32 %v1393, %v1874
    %v1876 = vpop.f32.mrb[0].mxu0
    %v1877 = vadd.f32 %v1397, %v1876
    %v1878 = vpop.f32.mrb[0].mxu0
    %v1879 = vadd.f32 %v1393, %v1878
    %v1880 = vpop.f32.mrb[0].mxu0
    %v1881 = vadd.f32 %v1397, %v1880
    %1882 = vmatprep.mubr.bf16.mxu0 %v1294
    %1883 = vmatmul.mubr.bf16.gmra.mrb[0].mxu0 %v1293
    %v1884 = vpop.f32.mrb[0].mxu0
    %v1885 = vadd.f32 %v1393, %v1884
    %v1886 = vpop.f32.mrb[0].mxu0
    %v1887 = vadd.f32 %v1397, %v1886
    %v1888 = vpop.f32.mrb[0].mxu0
    %v1889 = vadd.f32 %v1393, %v1888
    %v1890 = vpop.f32.mrb[0].mxu0
    %v1891 = vadd.f32 %v1397, %v1890
    %1892 = vmatprep.mubr.bf16.mxu0 %v1299
    %1893 = vmatmul.mubr.bf16.gmra.mrb[0].mxu0 %v1298
    %v1894 = vpop.f32.mrb[0].mxu0
    %v1895 = vadd.f32 %v1393, %v1894
    %v1896 = vpop.f32.mrb[0].mxu0
    %v1897 = vadd.f32 %v1397, %v1896
    %v1898 = vpop.f32.mrb[0].mxu0
    %v1899 = vadd.f32 %v1393, %v1898
    %v1900 = vpop.f32.mrb[0].mxu0
    %v1901 = vadd.f32 %v1397, %v1900
    %1902 = vmatprep.mubr.bf16.mxu0 %v1304
    %1903 = vmatmul.mubr.bf16.gmra.mrb[0].mxu0 %v1303
    %v1904 = vpop.f32.mrb[0].mxu0
    %v1905 = vadd.f32 %v1393, %v1904
    %v1906 = vpop.f32.mrb[0].mxu0
    %v1907 = vadd.f32 %v1397, %v1906
    %v1908 = vpop.f32.mrb[0].mxu0
    %v1909 = vadd.f32 %v1393, %v1908
    %v1910 = vpop.f32.mrb[0].mxu0
    %v1911 = vadd.f32 %v1397, %v1910
    %1912 = vdwg.mxu0
    %1913 = vmatprep.subr.bf16.mxu0 %v1673
    %1914 = vmatpush1.bf16.msra.mxu0 %v1672
    %1915 = vmatprep.subr.bf16.mxu0 %v1675
    %1916 = vmatpush1.bf16.msra.mxu0 %v1674
    %1917 = vmatprep.subr.bf16.mxu0 %v1677
    %1918 = vmatpush1.bf16.msra.mxu0 %v1676
    %1919 = vmatprep.subr.bf16.mxu0 %v1679
    %1920 = vmatpush1.bf16.msra.mxu0 %v1678
    %1921 = vmatprep.subr.bf16.mxu0 %v1681
    %1922 = vmatpush1.bf16.msra.mxu0 %v1680
    %1923 = vmatprep.subr.bf16.mxu0 %v1683
    %1924 = vmatpush1.bf16.msra.mxu0 %v1682
    %1925 = vmatprep.subr.bf16.mxu0 %v1685
    %1926 = vmatpush1.bf16.msra.mxu0 %v1684
    %1927 = vmatprep.subr.bf16.mxu0 %v1687
    %1928 = vmatpush1.bf16.msra.mxu0 %v1686
    %1929 = vmatprep.subr.bf16.mxu0 %v1689
    %1930 = vmatpush1.bf16.msra.mxu0 %v1688
    %1931 = vmatprep.subr.bf16.mxu0 %v1691
    %1932 = vmatpush1.bf16.msra.mxu0 %v1690
    %1933 = vmatprep.subr.bf16.mxu0 %v1693
    %1934 = vmatpush1.bf16.msra.mxu0 %v1692
    %1935 = vmatprep.subr.bf16.mxu0 %v1695
    %1936 = vmatpush1.bf16.msra.mxu0 %v1694
    %1937 = vmatprep.subr.bf16.mxu0 %v1697
    %1938 = vmatpush1.bf16.msra.mxu0 %v1696
    %1939 = vmatprep.subr.bf16.mxu0 %v1699
    %1940 = vmatpush1.bf16.msra.mxu0 %v1698
    %1941 = vmatprep.subr.bf16.mxu0 %v1701
    %1942 = vmatpush1.bf16.msra.mxu0 %v1700
    %1943 = vmatprep.subr.bf16.mxu0 %v1703
    %1944 = vmatpush1.bf16.msra.mxu0 %v1702
    %1945 = vmatprep.mubr.bf16.mxu0 %v1271
    %1946 = vmatmul.mubr.bf16.gmra.mrb[0].mxu0 %v1270
    %v1947 = vpop.f32.mrb[0].mxu0
    %v1948 = vadd.f32 %v1835, %v1947
    %v1949 = vpop.f32.mrb[0].mxu0
    %v1950 = vadd.f32 %v1837, %v1949
    %v1951 = vpop.f32.mrb[0].mxu0
    %v1952 = vadd.f32 %v1839, %v1951
    %v1953 = vpop.f32.mrb[0].mxu0
    %v1954 = vadd.f32 %v1841, %v1953
    %1955 = vmatprep.mubr.bf16.mxu0 %v1276
    %1956 = vmatmul.mubr.bf16.gmra.mrb[0].mxu0 %v1275
    %v1957 = vpop.f32.mrb[0].mxu0
    %v1958 = vadd.f32 %v1845, %v1957
    %v1959 = vpop.f32.mrb[0].mxu0
    %v1960 = vadd.f32 %v1847, %v1959
    %v1961 = vpop.f32.mrb[0].mxu0
    %v1962 = vadd.f32 %v1849, %v1961
    %v1963 = vpop.f32.mrb[0].mxu0
    %v1964 = vadd.f32 %v1851, %v1963
    %1965 = vmatprep.mubr.bf16.mxu0 %v1281
    %1966 = vmatmul.mubr.bf16.gmra.mrb[0].mxu0 %v1280
    %v1967 = vpop.f32.mrb[0].mxu0
    %v1968 = vadd.f32 %v1855, %v1967
    %v1969 = vpop.f32.mrb[0].mxu0
    %v1970 = vadd.f32 %v1857, %v1969
    %v1971 = vpop.f32.mrb[0].mxu0
    %v1972 = vadd.f32 %v1859, %v1971
    %v1973 = vpop.f32.mrb[0].mxu0
    %v1974 = vadd.f32 %v1861, %v1973
    %1975 = vmatprep.mubr.bf16.mxu0 %v1286
    %1976 = vmatmul.mubr.bf16.gmra.mrb[0].mxu0 %v1285
    %v1977 = vpop.f32.mrb[0].mxu0
    %v1978 = vadd.f32 %v1865, %v1977
    %v1979 = vpop.f32.mrb[0].mxu0
    %v1980 = vadd.f32 %v1867, %v1979
    %v1981 = vpop.f32.mrb[0].mxu0
    %v1982 = vadd.f32 %v1869, %v1981
    %v1983 = vpop.f32.mrb[0].mxu0
    %v1984 = vadd.f32 %v1871, %v1983
    %1985 = vmatprep.mubr.bf16.mxu0 %v1291
    %1986 = vmatmul.mubr.bf16.gmra.mrb[0].mxu0 %v1290
    %v1987 = vpop.f32.mrb[0].mxu0
    %v1988 = vadd.f32 %v1875, %v1987
    %v1989 = vpop.f32.mrb[0].mxu0
    %v1990 = vadd.f32 %v1877, %v1989
    %v1991 = vpop.f32.mrb[0].mxu0
    %v1992 = vadd.f32 %v1879, %v1991
    %v1993 = vpop.f32.mrb[0].mxu0
    %v1994 = vadd.f32 %v1881, %v1993
    %1995 = vmatprep.mubr.bf16.mxu0 %v1296
    %1996 = vmatmul.mubr.bf16.gmra.mrb[0].mxu0 %v1295
    %v1997 = vpop.f32.mrb[0].mxu0
    %v1998 = vadd.f32 %v1885, %v1997
    %v1999 = vpop.f32.mrb[0].mxu0
    %v2000 = vadd.f32 %v1887, %v1999
    %v2001 = vpop.f32.mrb[0].mxu0
    %v2002 = vadd.f32 %v1889, %v2001
    %v2003 = vpop.f32.mrb[0].mxu0
    %v2004 = vadd.f32 %v1891, %v2003
    %2005 = vmatprep.mubr.bf16.mxu0 %v1301
    %2006 = vmatmul.mubr.bf16.gmra.mrb[0].mxu0 %v1300
    %v2007 = vpop.f32.mrb[0].mxu0
    %v2008 = vadd.f32 %v1895, %v2007
    %v2009 = vpop.f32.mrb[0].mxu0
    %v2010 = vadd.f32 %v1897, %v2009
    %v2011 = vpop.f32.mrb[0].mxu0
    %v2012 = vadd.f32 %v1899, %v2011
    %v2013 = vpop.f32.mrb[0].mxu0
    %v2014 = vadd.f32 %v1901, %v2013
    %2015 = vmatprep.mubr.bf16.mxu0 %v1306
    %2016 = vmatmul.mubr.bf16.gmra.mrb[0].mxu0 %v1305
    %v2017 = vpop.f32.mrb[0].mxu0
    %v2018 = vadd.f32 %v1905, %v2017
    %v2019 = vpop.f32.mrb[0].mxu0
    %v2020 = vadd.f32 %v1907, %v2019
    %v2021 = vpop.f32.mrb[0].mxu0
    %v2022 = vadd.f32 %v1909, %v2021
    %v2023 = vpop.f32.mrb[0].mxu0
    %v2024 = vadd.f32 %v1911, %v2023
    %2025 = vdwg.mxu0
    %2026 = vmatprep.subr.bf16.mxu0 %v1705
    %2027 = vmatpush1.bf16.msra.mxu0 %v1704
    %2028 = vmatprep.subr.bf16.mxu0 %v1707
    %2029 = vmatpush1.bf16.msra.mxu0 %v1706
    %2030 = vmatprep.subr.bf16.mxu0 %v1709
    %2031 = vmatpush1.bf16.msra.mxu0 %v1708
    %2032 = vmatprep.subr.bf16.mxu0 %v1711
    %2033 = vmatpush1.bf16.msra.mxu0 %v1710
    %2034 = vmatprep.subr.bf16.mxu0 %v1713
    %2035 = vmatpush1.bf16.msra.mxu0 %v1712
    %2036 = vmatprep.subr.bf16.mxu0 %v1715
    %2037 = vmatpush1.bf16.msra.mxu0 %v1714
    %2038 = vmatprep.subr.bf16.mxu0 %v1717
    %2039 = vmatpush1.bf16.msra.mxu0 %v1716
    %2040 = vmatprep.subr.bf16.mxu0 %v1719
    %2041 = vmatpush1.bf16.msra.mxu0 %v1718
    %2042 = vmatprep.subr.bf16.mxu0 0
    %2043 = vmatpush1.bf16.msra.mxu0 0
    %2044 = vmatprep.subr.bf16.mxu0 0
    %2045 = vmatpush1.bf16.msra.mxu0 0
    %2046 = vmatprep.subr.bf16.mxu0 0
    %2047 = vmatpush1.bf16.msra.mxu0 0
    %2048 = vmatprep.subr.bf16.mxu0 0
    %2049 = vmatpush1.bf16.msra.mxu0 0
    %2050 = vmatprep.subr.bf16.mxu0 0
    %2051 = vmatpush1.bf16.msra.mxu0 0
    %2052 = vmatprep.subr.bf16.mxu0 0
    %2053 = vmatpush1.bf16.msra.mxu0 0
    %2054 = vmatprep.subr.bf16.mxu0 0
    %2055 = vmatpush1.bf16.msra.mxu0 0
    %2056 = vmatprep.subr.bf16.mxu0 0
    %2057 = vmatpush1.bf16.msra.mxu0 0
    %2058 = vmatprep.mubr.bf16.mxu0 0
    %2059 = vmatmul.mubr.bf16.gmra.mrb[0].mxu0 %v1272
    %v2060 = vpop.f32.mrb[0].mxu0
    %v2061 = vadd.f32 %v1948, %v2060
    %v2062 = vpop.f32.mrb[0].mxu0
    %v2063 = vadd.f32 %v1950, %v2062
    %v2064 = vpop.f32.mrb[0].mxu0
    %v2065 = vadd.f32 %v1952, %v2064
    %v2066 = vpop.f32.mrb[0].mxu0
    %v2067 = vadd.f32 %v1954, %v2066
    %2068 = vmatprep.mubr.bf16.mxu0 0
    %2069 = vmatmul.mubr.bf16.gmra.mrb[0].mxu0 %v1277
    %v2070 = vpop.f32.mrb[0].mxu0
    %v2071 = vadd.f32 %v1958, %v2070
    %v2072 = vpop.f32.mrb[0].mxu0
    %v2073 = vadd.f32 %v1960, %v2072
    %v2074 = vpop.f32.mrb[0].mxu0
    %v2075 = vadd.f32 %v1962, %v2074
    %v2076 = vpop.f32.mrb[0].mxu0
    %v2077 = vadd.f32 %v1964, %v2076
    %2078 = vmatprep.mubr.bf16.mxu0 0
    %2079 = vmatmul.mubr.bf16.gmra.mrb[0].mxu0 %v1282
    %v2080 = vpop.f32.mrb[0].mxu0
    %v2081 = vadd.f32 %v1968, %v2080
    %v2082 = vpop.f32.mrb[0].mxu0
    %v2083 = vadd.f32 %v1970, %v2082
    %v2084 = vpop.f32.mrb[0].mxu0
    %v2085 = vadd.f32 %v1972, %v2084
    %v2086 = vpop.f32.mrb[0].mxu0
    %v2087 = vadd.f32 %v1974, %v2086
    %2088 = vmatprep.mubr.bf16.mxu0 0
    %2089 = vmatmul.mubr.bf16.gmra.mrb[0].mxu0 %v1287
    %v2090 = vpop.f32.mrb[0].mxu0
    %v2091 = vadd.f32 %v1978, %v2090
    %v2092 = vpop.f32.mrb[0].mxu0
    %v2093 = vadd.f32 %v1980, %v2092
    %v2094 = vpop.f32.mrb[0].mxu0
    %v2095 = vadd.f32 %v1982, %v2094
    %v2096 = vpop.f32.mrb[0].mxu0
    %v2097 = vadd.f32 %v1984, %v2096
    %2098 = vmatprep.mubr.bf16.mxu0 0
    %2099 = vmatmul.mubr.bf16.gmra.mrb[0].mxu0 %v1292
    %v2100 = vpop.f32.mrb[0].mxu0
    %v2101 = vadd.f32 %v1988, %v2100
    %v2102 = vpop.f32.mrb[0].mxu0
    %v2103 = vadd.f32 %v1990, %v2102
    %v2104 = vpop.f32.mrb[0].mxu0
    %v2105 = vadd.f32 %v1992, %v2104
    %v2106 = vpop.f32.mrb[0].mxu0
    %v2107 = vadd.f32 %v1994, %v2106
    %2108 = vmatprep.mubr.bf16.mxu0 0
    %2109 = vmatmul.mubr.bf16.gmra.mrb[0].mxu0 %v1297
    %v2110 = vpop.f32.mrb[0].mxu0
    %v2111 = vadd.f32 %v1998, %v2110
    %v2112 = vpop.f32.mrb[0].mxu0
    %v2113 = vadd.f32 %v2000, %v2112
    %v2114 = vpop.f32.mrb[0].mxu0
    %v2115 = vadd.f32 %v2002, %v2114
    %v2116 = vpop.f32.mrb[0].mxu0
    %v2117 = vadd.f32 %v2004, %v2116
    %2118 = vmatprep.mubr.bf16.mxu0 0
    %2119 = vmatmul.mubr.bf16.gmra.mrb[0].mxu0 %v1302
    %v2120 = vpop.f32.mrb[0].mxu0
    %v2121 = vadd.f32 %v2008, %v2120
    %v2122 = vpop.f32.mrb[0].mxu0
    %v2123 = vadd.f32 %v2010, %v2122
    %v2124 = vpop.f32.mrb[0].mxu0
    %v2125 = vadd.f32 %v2012, %v2124
    %v2126 = vpop.f32.mrb[0].mxu0
    %v2127 = vadd.f32 %v2014, %v2126
    %2128 = vmatprep.mubr.bf16.mxu0 0
    %2129 = vmatmul.mubr.bf16.gmra.mrb[0].mxu0 %v1307
    %v2130 = vpop.f32.mrb[0].mxu0
    %v2131 = vadd.f32 %v2018, %v2130
    %v2132 = vpop.f32.mrb[0].mxu0
    %v2133 = vadd.f32 %v2020, %v2132
    %v2134 = vpop.f32.mrb[0].mxu0
    %v2135 = vadd.f32 %v2022, %v2134
    %v2136 = vpop.f32.mrb[0].mxu0
    %v2137 = vadd.f32 %v2024, %v2136
    %2138 = vdwg.mxu0
    %v2139 = vsub.f32 0.0, %v2061
    %v2140 = vsub.f32 0.0, %v2063
    %v2141 = vsub.f32 0.0, %v2065
    %v2142 = vsub.f32 0.0, %v2067
    %v2143 = vsub.f32 0.0, %v2071
    %v2144 = vsub.f32 0.0, %v2073
    %v2145 = vsub.f32 0.0, %v2075
    %v2146 = vsub.f32 0.0, %v2077
    %v2147 = vsub.f32 0.0, %v2081
    %v2148 = vsub.f32 0.0, %v2083
    %v2149 = vsub.f32 0.0, %v2085
    %v2150 = vsub.f32 0.0, %v2087
    %v2151 = vsub.f32 0.0, %v2091
    %v2152 = vsub.f32 0.0, %v2093
    %v2153 = vsub.f32 0.0, %v2095
    %v2154 = vsub.f32 0.0, %v2097
    %v2155 = vsub.f32 0.0, %v2101
    %v2156 = vsub.f32 0.0, %v2103
    %v2157 = vsub.f32 0.0, %v2105
    %v2158 = vsub.f32 0.0, %v2107
    %v2159 = vsub.f32 0.0, %v2111
    %v2160 = vsub.f32 0.0, %v2113
    %v2161 = vsub.f32 0.0, %v2115
    %v2162 = vsub.f32 0.0, %v2117
    %v2163 = vsub.f32 0.0, %v2121
    %v2164 = vsub.f32 0.0, %v2123
    %v2165 = vsub.f32 0.0, %v2125
    %v2166 = vsub.f32 0.0, %v2127
    %v2167 = vsub.f32 0.0, %v2131
    %v2168 = vsub.f32 0.0, %v2133
    %v2169 = vsub.f32 0.0, %v2135
    %v2170 = vsub.f32 0.0, %v2137
    %v2171 = vmul.f32 %v2139, 1.442695
    %v2172 = vpow.pop %v2171
    %v2173 = vmul.f32 %v2140, 1.442695
    %v2174 = vpow.pop %v2173
    %v2175 = vmul.f32 %v2141, 1.442695
    %v2176 = vpow.pop %v2175
    %v2177 = vmul.f32 %v2142, 1.442695
    %v2178 = vpow.pop %v2177
    %v2179 = vmul.f32 %v2143, 1.442695
    %v2180 = vpow.pop %v2179
    %v2181 = vmul.f32 %v2144, 1.442695
    %v2182 = vpow.pop %v2181
    %v2183 = vmul.f32 %v2145, 1.442695
    %v2184 = vpow.pop %v2183
    %v2185 = vmul.f32 %v2146, 1.442695
    %v2186 = vpow.pop %v2185
    %v2187 = vmul.f32 %v2147, 1.442695
    %v2188 = vpow.pop %v2187
    %v2189 = vmul.f32 %v2148, 1.442695
    %v2190 = vpow.pop %v2189
    %v2191 = vmul.f32 %v2149, 1.442695
    %v2192 = vpow.pop %v2191
    %v2193 = vmul.f32 %v2150, 1.442695
    %v2194 = vpow.pop %v2193
    %v2195 = vmul.f32 %v2151, 1.442695
    %v2196 = vpow.pop %v2195
    %v2197 = vmul.f32 %v2152, 1.442695
    %v2198 = vpow.pop %v2197
    %v2199 = vmul.f32 %v2153, 1.442695
    %v2200 = vpow.pop %v2199
    %v2201 = vmul.f32 %v2154, 1.442695
    %v2202 = vpow.pop %v2201
    %v2203 = vmul.f32 %v2155, 1.442695
    %v2204 = vpow.pop %v2203
    %v2205 = vmul.f32 %v2156, 1.442695
    %v2206 = vpow.pop %v2205
    %v2207 = vmul.f32 %v2157, 1.442695
    %v2208 = vpow.pop %v2207
    %v2209 = vmul.f32 %v2158, 1.442695
    %v2210 = vpow.pop %v2209
    %v2211 = vmul.f32 %v2159, 1.442695
    %v2212 = vpow.pop %v2211
    %v2213 = vmul.f32 %v2160, 1.442695
    %v2214 = vpow.pop %v2213
    %v2215 = vmul.f32 %v2161, 1.442695
    %v2216 = vpow.pop %v2215
    %v2217 = vmul.f32 %v2162, 1.442695
    %v2218 = vpow.pop %v2217
    %v2219 = vmul.f32 %v2163, 1.442695
    %v2220 = vpow.pop %v2219
    %v2221 = vmul.f32 %v2164, 1.442695
    %v2222 = vpow.pop %v2221
    %v2223 = vmul.f32 %v2165, 1.442695
    %v2224 = vpow.pop %v2223
    %v2225 = vmul.f32 %v2166, 1.442695
    %v2226 = vpow.pop %v2225
    %v2227 = vmul.f32 %v2167, 1.442695
    %v2228 = vpow.pop %v2227
    %v2229 = vmul.f32 %v2168, 1.442695
    %v2230 = vpow.pop %v2229
    %v2231 = vmul.f32 %v2169, 1.442695
    %v2232 = vpow.pop %v2231
    %v2233 = vmul.f32 %v2170, 1.442695
    %v2234 = vpow.pop %v2233
    %v2235 = vadd.f32 %v2172, 1.0
    %v2236 = vadd.f32 %v2174, 1.0
    %v2237 = vadd.f32 %v2176, 1.0
    %v2238 = vadd.f32 %v2178, 1.0
    %v2239 = vadd.f32 %v2180, 1.0
    %v2240 = vadd.f32 %v2182, 1.0
    %v2241 = vadd.f32 %v2184, 1.0
    %v2242 = vadd.f32 %v2186, 1.0
    %v2243 = vadd.f32 %v2188, 1.0
    %v2244 = vadd.f32 %v2190, 1.0
    %v2245 = vadd.f32 %v2192, 1.0
    %v2246 = vadd.f32 %v2194, 1.0
    %v2247 = vadd.f32 %v2196, 1.0
    %v2248 = vadd.f32 %v2198, 1.0
    %v2249 = vadd.f32 %v2200, 1.0
    %v2250 = vadd.f32 %v2202, 1.0
    %v2251 = vadd.f32 %v2204, 1.0
    %v2252 = vadd.f32 %v2206, 1.0
    %v2253 = vadd.f32 %v2208, 1.0
    %v2254 = vadd.f32 %v2210, 1.0
    %v2255 = vadd.f32 %v2212, 1.0
    %v2256 = vadd.f32 %v2214, 1.0
    %v2257 = vadd.f32 %v2216, 1.0
    %v2258 = vadd.f32 %v2218, 1.0
    %v2259 = vadd.f32 %v2220, 1.0
    %v2260 = vadd.f32 %v2222, 1.0
    %v2261 = vadd.f32 %v2224, 1.0
    %v2262 = vadd.f32 %v2226, 1.0
    %v2263 = vadd.f32 %v2228, 1.0
    %v2264 = vadd.f32 %v2230, 1.0
    %v2265 = vadd.f32 %v2232, 1.0
    %v2266 = vadd.f32 %v2234, 1.0
    %v2267 = vrcp.pop %v2235
    %v2268 = vrcp.pop %v2236
    %v2269 = vrcp.pop %v2237
    %v2270 = vrcp.pop %v2238
    %v2271 = vrcp.pop %v2239
    %v2272 = vrcp.pop %v2240
    %v2273 = vrcp.pop %v2241
    %v2274 = vrcp.pop %v2242
    %v2275 = vrcp.pop %v2243
    %v2276 = vrcp.pop %v2244
    %v2277 = vrcp.pop %v2245
    %v2278 = vrcp.pop %v2246
    %v2279 = vrcp.pop %v2247
    %v2280 = vrcp.pop %v2248
    %v2281 = vrcp.pop %v2249
    %v2282 = vrcp.pop %v2250
    %v2283 = vrcp.pop %v2251
    %v2284 = vrcp.pop %v2252
    %v2285 = vrcp.pop %v2253
    %v2286 = vrcp.pop %v2254
    %v2287 = vrcp.pop %v2255
    %v2288 = vrcp.pop %v2256
    %v2289 = vrcp.pop %v2257
    %v2290 = vrcp.pop %v2258
    %v2291 = vrcp.pop %v2259
    %v2292 = vrcp.pop %v2260
    %v2293 = vrcp.pop %v2261
    %v2294 = vrcp.pop %v2262
    %v2295 = vrcp.pop %v2263
    %v2296 = vrcp.pop %v2264
    %v2297 = vrcp.pop %v2265
    %v2298 = vrcp.pop %v2266
    %v2299 = vpack.c.bf16 %v2269, %v2267
    %v2300 = vpack.c.bf16 %v2270, %v2268
    %v2301 = vpack.c.bf16 %v2273, %v2271
    %v2302 = vpack.c.bf16 %v2274, %v2272
    %v2303 = vpack.c.bf16 %v2277, %v2275
    %v2304 = vpack.c.bf16 %v2278, %v2276
    %v2305 = vpack.c.bf16 %v2281, %v2279
    %v2306 = vpack.c.bf16 %v2282, %v2280
    %v2307 = vpack.c.bf16 %v2285, %v2283
    %v2308 = vpack.c.bf16 %v2286, %v2284
    %v2309 = vpack.c.bf16 %v2289, %v2287
    %v2310 = vpack.c.bf16 %v2290, %v2288
    %v2311 = vpack.c.bf16 %v2293, %v2291
    %v2312 = vpack.c.bf16 %v2294, %v2292
    %v2313 = vpack.c.bf16 %v2297, %v2295
    %v2314 = vpack.c.bf16 %v2298, %v2296
    %v2315 = vld [vmem:[%s5] sm:$0xf]
    %v2316 = vld [vmem:[%s5 + $0x4] sm:$0xf]
    %v2317 = vld [vmem:[%s5 + $0x8] sm:$0xf]
    %v2318 = vld [vmem:[%s5 + $0xc] sm:$0xf]
    %v2319 = vld [vmem:[%s5 + $0x10] sm:$0xf]
    %v2320 = vld [vmem:[%s5 + $0x14] sm:$0xf]
    %v2321 = vld [vmem:[%s5 + $0x18] sm:$0xf]
    %v2322 = vld [vmem:[%s5 + $0x1c] sm:$0xf]
    %v2323 = vld [vmem:[%s5 + $0x20] sm:$0xf]
    %v2324 = vld [vmem:[%s5 + $0x24] sm:$0xf]
    %v2325 = vld [vmem:[%s5 + $0x28] sm:$0xf]
    %v2326 = vld [vmem:[%s5 + $0x2c] sm:$0xf]
    %v2327 = vld [vmem:[%s5 + $0x30] sm:$0xf]
    %v2328 = vld [vmem:[%s5 + $0x34] sm:$0xf]
    %v2329 = vld [vmem:[%s5 + $0x38] sm:$0xf]
    %v2330 = vld [vmem:[%s5 + $0x3c] sm:$0xf]
    %v2331 = vld [vmem:[%s5 + $0x40] sm:$0xf]
    %v2332 = vld [vmem:[%s5 + $0x44] sm:$0xf]
    %v2333 = vld [vmem:[%s5 + $0x48] sm:$0xf]
    %v2334 = vld [vmem:[%s5 + $0x4c] sm:$0xf]
    %v2335 = vld [vmem:[%s5 + $0x50] sm:$0xf]
    %v2336 = vld [vmem:[%s5 + $0x54] sm:$0xf]
    %v2337 = vld [vmem:[%s5 + $0x58] sm:$0xf]
    %v2338 = vld [vmem:[%s5 + $0x5c] sm:$0xf]
    %v2339 = vld [vmem:[%s5 + $0x60] sm:$0xf]
    %v2340 = vld [vmem:[%s5 + $0x64] sm:$0xf]
    %v2341 = vld [vmem:[%s5 + $0x68] sm:$0xf]
    %v2342 = vld [vmem:[%s5 + $0x6c] sm:$0xf]
    %v2343 = vld [vmem:[%s5 + $0x70] sm:$0xf]
    %v2344 = vld [vmem:[%s5 + $0x74] sm:$0xf]
    %v2345 = vld [vmem:[%s5 + $0x78] sm:$0xf]
    %v2346 = vld [vmem:[%s5 + $0x7c] sm:$0xf]
    %v2347 = vld [vmem:[%s6] sm:$0x1]
    %v2349 = vlaneseq
    %v2350 = vshrl.u32 %v2349, 7
    %v2351 = vsub.s32 0, %v2350
    %v2352 = vrot.slane %v2347, %v2351
    %v2386 = vunpack.c.l.b16 %v2315
    %v2387 = vunpack.c.l.b16 %v2316
    %v2388 = vunpack.c.l.b16 %v2317
    %v2389 = vunpack.c.l.b16 %v2318
    %v2390 = vunpack.c.l.b16 %v2319
    %v2391 = vunpack.c.l.b16 %v2320
    %v2392 = vunpack.c.l.b16 %v2321
    %v2393 = vunpack.c.l.b16 %v2322
    %v2394 = vunpack.c.l.b16 %v2323
    %v2395 = vunpack.c.l.b16 %v2324
    %v2396 = vunpack.c.l.b16 %v2325
    %v2397 = vunpack.c.l.b16 %v2326
    %v2398 = vunpack.c.l.b16 %v2327
    %v2399 = vunpack.c.l.b16 %v2328
    %v2400 = vunpack.c.l.b16 %v2329
    %v2401 = vunpack.c.l.b16 %v2330
    %v2402 = vunpack.c.l.b16 %v2331
    %v2403 = vunpack.c.l.b16 %v2332
    %v2404 = vunpack.c.l.b16 %v2333
    %v2405 = vunpack.c.l.b16 %v2334
    %v2406 = vunpack.c.l.b16 %v2335
    %v2407 = vunpack.c.l.b16 %v2336
    %v2408 = vunpack.c.l.b16 %v2337
    %v2409 = vunpack.c.l.b16 %v2338
    %v2410 = vunpack.c.l.b16 %v2339
    %v2411 = vunpack.c.l.b16 %v2340
    %v2412 = vunpack.c.l.b16 %v2341
    %v2413 = vunpack.c.l.b16 %v2342
    %v2414 = vunpack.c.l.b16 %v2343
    %v2415 = vunpack.c.l.b16 %v2344
    %v2416 = vunpack.c.l.b16 %v2345
    %v2417 = vunpack.c.l.b16 %v2346
    %v2418 = vpack.c.b16 %v2387, %v2386
    %v2419 = vpack.c.b16 %v2389, %v2388
    %v2420 = vpack.c.b16 %v2391, %v2390
    %v2421 = vpack.c.b16 %v2393, %v2392
    %v2422 = vpack.c.b16 %v2395, %v2394
    %v2423 = vpack.c.b16 %v2397, %v2396
    %v2424 = vpack.c.b16 %v2399, %v2398
    %v2425 = vpack.c.b16 %v2401, %v2400
    %v2426 = vpack.c.b16 %v2403, %v2402
    %v2427 = vpack.c.b16 %v2405, %v2404
    %v2428 = vpack.c.b16 %v2407, %v2406
    %v2429 = vpack.c.b16 %v2409, %v2408
    %v2430 = vpack.c.b16 %v2411, %v2410
    %v2431 = vpack.c.b16 %v2413, %v2412
    %v2432 = vpack.c.b16 %v2415, %v2414
    %v2433 = vpack.c.b16 %v2417, %v2416
    %2450 = vmatprep.subr.bf16.mxu0 0
    %2451 = vmatpush1.bf16.msra.mxu0 %v2418
    %2452 = vmatprep.subr.bf16.mxu0 0
    %2453 = vmatpush1.bf16.msra.mxu0 %v2419
    %2454 = vmatprep.subr.bf16.mxu0 0
    %2455 = vmatpush1.bf16.msra.mxu0 %v2420
    %2456 = vmatprep.subr.bf16.mxu0 0
    %2457 = vmatpush1.bf16.msra.mxu0 %v2421
    %2458 = vmatprep.subr.bf16.mxu0 0
    %2459 = vmatpush1.bf16.msra.mxu0 %v2422
    %2460 = vmatprep.subr.bf16.mxu0 0
    %2461 = vmatpush1.bf16.msra.mxu0 %v2423
    %2462 = vmatprep.subr.bf16.mxu0 0
    %2463 = vmatpush1.bf16.msra.mxu0 %v2424
    %2464 = vmatprep.subr.bf16.mxu0 0
    %2465 = vmatpush1.bf16.msra.mxu0 %v2425
    %2466 = vmatprep.subr.bf16.mxu0 0
    %2467 = vmatpush1.bf16.msra.mxu0 %v2426
    %2468 = vmatprep.subr.bf16.mxu0 0
    %2469 = vmatpush1.bf16.msra.mxu0 %v2427
    %2470 = vmatprep.subr.bf16.mxu0 0
    %2471 = vmatpush1.bf16.msra.mxu0 %v2428
    %2472 = vmatprep.subr.bf16.mxu0 0
    %2473 = vmatpush1.bf16.msra.mxu0 %v2429
    %2474 = vmatprep.subr.bf16.mxu0 0
    %2475 = vmatpush1.bf16.msra.mxu0 %v2430
    %2476 = vmatprep.subr.bf16.mxu0 0
    %2477 = vmatpush1.bf16.msra.mxu0 %v2431
    %2478 = vmatprep.subr.bf16.mxu0 0
    %2479 = vmatpush1.bf16.msra.mxu0 %v2432
    %2480 = vmatprep.subr.bf16.mxu0 0
    %2481 = vmatpush1.bf16.msra.mxu0 %v2433
    %2482 = vmatprep.mubr.bf16.mxu0 %v2300
    %2483 = vmatmul.mubr.bf16.gmra.mrb[0].mxu0 %v2299
    %v2484 = vpop.f32.mrb[0].mxu0
    %v2485 = vadd.f32 %v2352, %v2484
    %v2486 = vpop.f32.mrb[0].mxu0
    %v2487 = vpop.f32.mrb[0].mxu0
    %v2488 = vadd.f32 %v2352, %v2487
    %v2489 = vpop.f32.mrb[0].mxu0
    %2490 = vmatprep.mubr.bf16.mxu0 %v2302
    %2491 = vmatmul.mubr.bf16.gmra.mrb[0].mxu0 %v2301
    %v2492 = vpop.f32.mrb[0].mxu0
    %v2493 = vadd.f32 %v2352, %v2492
    %v2494 = vpop.f32.mrb[0].mxu0
    %v2495 = vpop.f32.mrb[0].mxu0
    %v2496 = vadd.f32 %v2352, %v2495
    %v2497 = vpop.f32.mrb[0].mxu0
    %2498 = vmatprep.mubr.bf16.mxu0 %v2304
    %2499 = vmatmul.mubr.bf16.gmra.mrb[0].mxu0 %v2303
    %v2500 = vpop.f32.mrb[0].mxu0
    %v2501 = vadd.f32 %v2352, %v2500
    %v2502 = vpop.f32.mrb[0].mxu0
    %v2503 = vpop.f32.mrb[0].mxu0
    %v2504 = vadd.f32 %v2352, %v2503
    %v2505 = vpop.f32.mrb[0].mxu0
    %2506 = vmatprep.mubr.bf16.mxu0 %v2306
    %2507 = vmatmul.mubr.bf16.gmra.mrb[0].mxu0 %v2305
    %v2508 = vpop.f32.mrb[0].mxu0
    %v2509 = vadd.f32 %v2352, %v2508
    %v2510 = vpop.f32.mrb[0].mxu0
    %v2511 = vpop.f32.mrb[0].mxu0
    %v2512 = vadd.f32 %v2352, %v2511
    %v2513 = vpop.f32.mrb[0].mxu0
    %2514 = vmatprep.mubr.bf16.mxu0 %v2308
    %2515 = vmatmul.mubr.bf16.gmra.mrb[0].mxu0 %v2307
    %v2516 = vpop.f32.mrb[0].mxu0
    %v2517 = vadd.f32 %v2352, %v2516
    %v2518 = vpop.f32.mrb[0].mxu0
    %v2519 = vpop.f32.mrb[0].mxu0
    %v2520 = vadd.f32 %v2352, %v2519
    %v2521 = vpop.f32.mrb[0].mxu0
    %2522 = vmatprep.mubr.bf16.mxu0 %v2310
    %2523 = vmatmul.mubr.bf16.gmra.mrb[0].mxu0 %v2309
    %v2524 = vpop.f32.mrb[0].mxu0
    %v2525 = vadd.f32 %v2352, %v2524
    %v2526 = vpop.f32.mrb[0].mxu0
    %v2527 = vpop.f32.mrb[0].mxu0
    %v2528 = vadd.f32 %v2352, %v2527
    %v2529 = vpop.f32.mrb[0].mxu0
    %2530 = vmatprep.mubr.bf16.mxu0 %v2312
    %2531 = vmatmul.mubr.bf16.gmra.mrb[0].mxu0 %v2311
    %v2532 = vpop.f32.mrb[0].mxu0
    %v2533 = vadd.f32 %v2352, %v2532
    %v2534 = vpop.f32.mrb[0].mxu0
    %v2535 = vpop.f32.mrb[0].mxu0
    %v2536 = vadd.f32 %v2352, %v2535
    %v2537 = vpop.f32.mrb[0].mxu0
    %2538 = vmatprep.mubr.bf16.mxu0 %v2314
    %2539 = vmatmul.mubr.bf16.gmra.mrb[0].mxu0 %v2313
    %v2540 = vpop.f32.mrb[0].mxu0
    %v2541 = vadd.f32 %v2352, %v2540
    %v2542 = vpop.f32.mrb[0].mxu0
    %v2543 = vpop.f32.mrb[0].mxu0
    %v2544 = vadd.f32 %v2352, %v2543
    %v2545 = vpop.f32.mrb[0].mxu0
    %2546 = vdwg.mxu0
    %v2547 = vpack.c.bf16 %v2488, %v2485
    %v2548 = vpack.c.bf16 %v2496, %v2493
    %v2549 = vpack.c.bf16 %v2504, %v2501
    %v2550 = vpack.c.bf16 %v2512, %v2509
    %v2551 = vpack.c.bf16 %v2520, %v2517
    %v2552 = vpack.c.bf16 %v2528, %v2525
    %v2553 = vpack.c.bf16 %v2536, %v2533
    %v2554 = vpack.c.bf16 %v2544, %v2541
    %v2563 = vunpack.c.l.b16 %v2547
    %v2564 = vunpack.c.h.b16 %v2547
    %v2565 = vunpack.c.l.b16 %v2548
    %v2566 = vunpack.c.h.b16 %v2548
    %v2567 = vunpack.c.l.b16 %v2549
    %v2568 = vunpack.c.h.b16 %v2549
    %v2569 = vunpack.c.l.b16 %v2550
    %v2570 = vunpack.c.h.b16 %v2550
    %v2571 = vunpack.c.l.b16 %v2551
    %v2572 = vunpack.c.h.b16 %v2551
    %v2573 = vunpack.c.l.b16 %v2552
    %v2574 = vunpack.c.h.b16 %v2552
    %v2575 = vunpack.c.l.b16 %v2553
    %v2576 = vunpack.c.h.b16 %v2553
    %v2577 = vunpack.c.l.b16 %v2554
    %v2578 = vunpack.c.h.b16 %v2554
    %v2579 = vpack.c.b16 %v2563, %v2563
    %v2580 = vpack.c.b16 %v2564, %v2564
    %v2581 = vpack.c.b16 %v2565, %v2565
    %v2582 = vpack.c.b16 %v2566, %v2566
    %v2583 = vpack.c.b16 %v2567, %v2567
    %v2584 = vpack.c.b16 %v2568, %v2568
    %v2585 = vpack.c.b16 %v2569, %v2569
    %v2586 = vpack.c.b16 %v2570, %v2570
    %v2587 = vpack.c.b16 %v2571, %v2571
    %v2588 = vpack.c.b16 %v2572, %v2572
    %v2589 = vpack.c.b16 %v2573, %v2573
    %v2590 = vpack.c.b16 %v2574, %v2574
    %v2591 = vpack.c.b16 %v2575, %v2575
    %v2592 = vpack.c.b16 %v2576, %v2576
    %v2593 = vpack.c.b16 %v2577, %v2577
    %v2594 = vpack.c.b16 %v2578, %v2578
    %2611 = vst [vmem:[#allocation7] sm:$0xf] %v2579
    %2612 = vst [vmem:[#allocation7 + $0x4] sm:$0xf] %v2580
    %2613 = vst [vmem:[#allocation7 + $0x8] sm:$0xf] %v2581
    %2614 = vst [vmem:[#allocation7 + $0xc] sm:$0xf] %v2582
    %2615 = vst [vmem:[#allocation7 + $0x10] sm:$0xf] %v2583
    %2616 = vst [vmem:[#allocation7 + $0x14] sm:$0xf] %v2584
    %2617 = vst [vmem:[#allocation7 + $0x18] sm:$0xf] %v2585
    %2618 = vst [vmem:[#allocation7 + $0x1c] sm:$0xf] %v2586
    %2619 = vst [vmem:[#allocation7 + $0x20] sm:$0xf] %v2587
    %2620 = vst [vmem:[#allocation7 + $0x24] sm:$0xf] %v2588
    %2621 = vst [vmem:[#allocation7 + $0x28] sm:$0xf] %v2589
    %2622 = vst [vmem:[#allocation7 + $0x2c] sm:$0xf] %v2590
    %2623 = vst [vmem:[#allocation7 + $0x30] sm:$0xf] %v2591
    %2624 = vst [vmem:[#allocation7 + $0x34] sm:$0xf] %v2592
    %2625 = vst [vmem:[#allocation7 + $0x38] sm:$0xf] %v2593
    %2626 = vst [vmem:[#allocation7 + $0x3c] sm:$0xf] %v2594
    // Predicated region
    $region38: #{tpu_custom_call.1} parent=1 // pred_check
      _
    $region39: #{tpu_custom_call.1} parent=1 // pred_check_branch
      %2628 = sbr.rel (0) target = $region41
    $region40: #{tpu_custom_call.1} parent=1 // pred_region
      %s2630 = ssub.s32 1024, 1024
      %2631 = vsyncadd [#allocation4], %s2630
      %s2632 = sshll.u32 [#allocation7], 4
      %s2633 = int_to_ptr.vmem [resolvable:$true] %s2632
      %2638 = dma.vmem_to_hbm [thread:$0]  %s2633, 1024, %s7, [#allocation4], 64, 64, 4
    $region41: #{tpu_custom_call.1} parent=1 // pred_fallthru
      _
    // Predicated region
    $region42: #{tpu_custom_call.1} parent=1 // pred_check
      _
    $region43: #{tpu_custom_call.1} parent=1 // pred_check_branch
      %2640 = sbr.rel (0) target = $region45
    $region44: #{tpu_custom_call.1} parent=1 // pred_region
      %2641 = dma.done [#allocation4], 1024
    $region45: #{tpu_custom_call.1} parent=1 // pred_fallthru
      _
    %2642 = vsyncpa [#allocation3], 1
    %2643 = vsyncpa [#allocation6], 1
    %2644 = vsyncpa [#allocation4], 1

</llo_original>
